<compile_context>
chip_gen: v7x
topology: tpu7x:2x2x1
jax: 0.10.0
libtpu: 0.0.40
codegen_flags: <defaults>
</compile_context>

<pallas_src>
import functools
import inspect

import jax
import jax.numpy as jnp
from jax.experimental import pallas as pl
from jax.experimental.pallas import tpu as pltpu


def _triplet_kernel(n, tile_n, tiles_per_core, d_chunk, margin, use_weight, mxu_dtype,
                    x_ref, tcol_ref, trow_ref, out_ref, sqrow_ref):
    f32 = jnp.float32
    c = pl.program_id(0)          # TensorCore (megacore) index
    i = pl.program_id(1)          # row-tile index within this core
    lane = jax.lax.broadcasted_iota(jnp.int32, (1, 1, 128), 2)

    # ---- per-core one-time setup (first step on this core) -------------------
    @pl.when(i == 0)
    def _():
        out_ref[...] = jnp.zeros_like(out_ref)
        sqrow_ref[...] = jnp.zeros_like(sqrow_ref)
        # Row vector of squared norms of ALL embeddings, shape (1, N), built on
        # the MXU as ones(1,dc) @ (x[:,dc]*x[:,dc])^T, accumulated over D-chunks
        # so the f32 upcast/square transient stays bounded to (N, d_chunk).
        ones_row = jnp.ones((1, d_chunk), f32)          # hoisted out of the loop
        n_chunks = x_ref.shape[1] // d_chunk

        def body(k, carry):
            c0 = pl.multiple_of(k * d_chunk, d_chunk)
            xb = x_ref[:, pl.ds(c0, d_chunk)].astype(f32)          # (N, d_chunk)
            part = jax.lax.dot_general(
                ones_row, xb * xb,
                dimension_numbers=(((1,), (1,)), ((), ())),
                preferred_element_type=f32)                        # (1, N)
            sqrow_ref[...] = sqrow_ref[...] + part
            return carry

        jax.lax.fori_loop(0, n_chunks, body, 0)

    # ---- this step's row tile -------------------------------------------------
    r0 = pl.multiple_of((c * tiles_per_core + i) * tile_n, tile_n)
    x_tile = x_ref[pl.ds(r0, tile_n), :]                           # (TN, Dp)
    xt_f = x_tile.astype(f32)

    # Gram block on the MXU: x_tile @ x_full^T.  Contracting the LAST dim of
    # both operands is the transposed-RHS form the MXU handles natively (same
    # pattern as flash-attention's 'bqd,bkd->bqk'); no per-step XLU transpose
    # of the resident x is emitted.
    if mxu_dtype is None:
        a_op, b_op = x_tile, x_ref[...]
    else:
        a_op, b_op = x_tile.astype(mxu_dtype), x_ref[...].astype(mxu_dtype)
    g = jax.lax.dot_general(
        a_op, b_op,
        dimension_numbers=(((1,), (1,)), ((), ())),
        preferred_element_type=f32)                                # (TN, N)

    sq_tile = jnp.sum(xt_f * xt_f, axis=1, keepdims=True)          # (TN, 1)
    sq_row = sqrow_ref[...]                                        # (1, N)
    d2 = jnp.maximum(sq_tile + sq_row - 2.0 * g, 1e-12)            # (TN, N)

    t_tile = tcol_ref[pl.ds(r0, tile_n), :]                        # (TN, 1) int32
    pos = t_tile == trow_ref[...]                                  # (TN, N) bool

    NEG_BIG = f32(-1e30)
    POS_BIG = f32(1e30)

    if use_weight:
        dist = jnp.sqrt(d2)
        # dist_ap = <dist, softmax_over_pos(dist)>; masked entries' exp underflow to 0.
        masked_ap = jnp.where(pos, dist, NEG_BIG)
        ap_max = jnp.max(masked_ap, axis=1, keepdims=True)
        ap_w = jnp.exp(masked_ap - ap_max)
        dist_ap = (jnp.sum(dist * ap_w, axis=1, keepdims=True)
                   / jnp.sum(ap_w, axis=1, keepdims=True))         # (TN, 1)
        # dist_an = <dist, softmin_over_neg(dist)>  (softmin = softmax(-x)).
        masked_an = jnp.where(pos, NEG_BIG, -dist)
        an_max = jnp.max(masked_an, axis=1, keepdims=True)
        an_w = jnp.exp(masked_an - an_max)
        dist_an = (jnp.sum(dist * an_w, axis=1, keepdims=True)
                   / jnp.sum(an_w, axis=1, keepdims=True))         # (TN, 1)
    else:
        # Hard max/min: sqrt is monotonic, so select on squared distances and
        # only sqrt the two (TN,1) results (avoids a full (TN,N) sqrt).
        ap2 = jnp.max(jnp.where(pos, d2, 0.0), axis=1, keepdims=True)
        an2 = jnp.min(jnp.where(pos, POS_BIG, d2), axis=1, keepdims=True)
        dist_ap = jnp.sqrt(ap2)
        dist_an = jnp.sqrt(an2)

    if margin == 'soft_margin':
        # SoftMarginLoss(reduce=False) with y=1: log(1 + exp(-(dist_an - dist_ap)))
        z = dist_ap - dist_an
        loss_mat = jnp.maximum(z, 0.0) + jnp.log1p(jnp.exp(-jnp.abs(z)))
    else:
        # MarginRankingLoss(margin, reduce=False), y=1: max(0, dist_ap - dist_an + margin)
        loss_mat = jnp.maximum(dist_ap - dist_an + f32(margin), 0.0)   # (TN, 1)

    # Un-normalized partial sums for this tile (normalized on the last step).
    p_loss = jnp.sum(loss_mat, keepdims=True)                          # (1, 1)
    p_pull = jnp.sum((dist_an > dist_ap).astype(f32), keepdims=True)
    p_act = jnp.sum((loss_mat > 0.001).astype(f32), keepdims=True)
    p_an = jnp.sum(dist_an, keepdims=True)
    p_ap = jnp.sum(dist_ap, keepdims=True)

    row = jnp.where(lane == 0, p_loss, 0.0)
    row = jnp.where(lane == 1, p_pull, row)
    row = jnp.where(lane == 2, p_act, row)
    row = jnp.where(lane == 3, p_an, row)
    row = jnp.where(lane == 4, p_ap, row)
    out_ref[...] = out_ref[...] + row

    # ---- per-core finalize (last step on this core) ---------------------------
    @pl.when(i == pl.num_programs(1) - 1)
    def _():
        inv_n = f32(1.0 / n)
        # lane 0 (loss), 3 (mean_an), 4 (mean_ap): /n; lane 1 (pull): *100/n;
        # lane 2 (active triplets): raw count.  Lanes >= 5 are zero.
        scale = jnp.where(lane == 1, f32(100.0 / n),
                          jnp.where(lane == 2, f32(1.0), inv_n))
        out_ref[...] = out_ref[...] * scale


def _supports_pipeline_mode():
    if not hasattr(pl, "Buffered"):
        return False
    try:
        return "pipeline_mode" in inspect.signature(pl.BlockSpec).parameters
    except (TypeError, ValueError):
        return True


def _vmem_capacity_bytes():
    try:
        return int(pltpu.get_tpu_info().vmem_capacity_bytes)
    except Exception:
        return 128 * 1024 * 1024


def _num_tensorcores():
    # Megacore chips (v4 / v7x class) expose 2 TensorCores per device that the
    # "parallel" grid axis can shard across; v5e/v6e have 1.
    try:
        kind = jax.devices()[0].device_kind.lower()
    except Exception:
        return 1
    return 2 if ("v4" in kind or "v7" in kind) else 1


def triplet_loss(inputs, targets, step=0, *, margin=0.0, use_weight=True,
                 tile_n=None, mxu_dtype=None):
    """Pallas implementation of TripletLoss.forward. `step` is unused (as in PyTorch).

    mxu_dtype: optionally cast ONLY the Gram-matmul operands (e.g. jnp.bfloat16 on
    v5e, where the f32 MXU path is slow).  Default None keeps the native dtype.
    """
    del step
    n, d = inputs.shape

    # Zero-pad the feature dim to a multiple of 128 (lane width): zero columns do
    # not change norms or the Gram matrix but make loads/MXU K lane-dense.
    d_pad = ((d + 127) // 128) * 128
    if d_pad != d:
        inputs = jnp.pad(inputs, ((0, 0), (0, d_pad - d)))

    t = targets.astype(jnp.int32)
    t_col = t.reshape(n, 1)
    t_row = t.reshape(1, n)

    # Generation-aware VMEM budget: capacity minus headroom, capped at 100 MiB
    # (v5e/v6e 128 MiB -> ~100 MiB, v7x 64 MiB -> 48 MiB).
    cap = _vmem_capacity_bytes()
    vmem_limit = max(32 * 1024 * 1024,
                     min(cap - 16 * 1024 * 1024, 100 * 1024 * 1024))

    single_buffer_ok = _supports_pipeline_mode()
    buf_factor = 1 if single_buffer_ok else 2          # resident-x buffering factor
    itemsize = jnp.dtype(inputs.dtype).itemsize

    if tile_n is None:
        # Budget = limit - resident footprint (x + labels + sqrow scratch) - headroom.
        # The weighted path keeps ~9 live (TN, N) f32 slabs per step.
        resident = buf_factor * n * d_pad * itemsize + n * 4 * 3
        avail = vmem_limit - resident - 4 * 1024 * 1024
        slabs = 9 if use_weight else 6
        divisors = [c for c in (512, 256, 128, 64, 32, 16, 8)
                    if c <= n and n % c == 0]
        fitting = [c for c in divisors if c * n * 4 * slabs <= avail]
        if fitting:
            tile_n = fitting[0]          # largest tile that fits the budget
        elif divisors:
            tile_n = divisors[-1]        # smallest aligned divisor (may spill)
        else:
            tile_n = n                   # single full-extent tile
    assert n % tile_n == 0, "tile_n must divide n"
    assert tile_n == n or tile_n % 8 == 0, "tile_n should be sublane-aligned"
    num_tiles = n // tile_n

    # Split row tiles across TensorCores (no-op on single-core chips).
    num_cores = _num_tensorcores()
    if num_cores > num_tiles or num_tiles % num_cores != 0:
        num_cores = 1
    tiles_per_core = num_tiles // num_cores

    # Chunk size (lane dim) for the one-time squared-norm pass.
    d_chunk = 256 if d_pad % 256 == 0 else 128
    d_chunk = min(d_chunk, d_pad)

    kernel = functools.partial(_triplet_kernel, n, tile_n, tiles_per_core,
                               d_chunk, margin, use_weight, mxu_dtype)

    def build(single_buffer):
        def in_spec(shape):
            imap = lambda c, i: (0,) * len(shape)
            if single_buffer:
                # Constant-index resident inputs: never re-fetched across the
                # grid, so single-buffer them to halve their VMEM footprint.
                return pl.BlockSpec(shape, imap, pipeline_mode=pl.Buffered(1))
            return pl.BlockSpec(shape, imap)

        return pl.pallas_call(
            kernel,
            out_shape=jax.ShapeDtypeStruct((num_cores, 1, 128), jnp.float32),
            grid_spec=pltpu.PrefetchScalarGridSpec(
                num_scalar_prefetch=0,
                grid=(num_cores, tiles_per_core),
                in_specs=[
                    in_spec((n, d_pad)),    # x: resident across the grid
                    in_spec((n, 1)),        # labels, column orientation
                    in_spec((1, n)),        # labels, row orientation
                ],
                # Per-core lane-dense accumulator row; resident across the
                # "arbitrary" (reduction) axis.
                out_specs=pl.BlockSpec((1, 1, 128), lambda c, i: (c, 0, 0)),
                scratch_shapes=[pltpu.VMEM((1, n), jnp.float32)],   # ||x_j||^2 row
            ),
            compiler_params=pltpu.CompilerParams(
                dimension_semantics=("parallel", "arbitrary"),
                vmem_limit_bytes=vmem_limit,
            ),
        )

    attempts = [True, False] if single_buffer_ok else [False]
    out, last_err = None, None
    for sb in attempts:
        try:
            out = build(sb)(inputs, t_col, t_row)
            break
        except Exception as e:   # fall back to default buffering if Buffered(1) is rejected
            last_err = e
    if out is None:
        raise last_err

    acc = jnp.sum(out, axis=(0, 1))     # sum the per-core (already normalized) rows
    return (acc[0], acc[1], acc[2], acc[3], acc[4])


def _triplet_loss_ref(inputs, targets, margin=0.0, use_weight=True):
    """Pure-JAX reference mirroring the PyTorch forward (sanity check)."""
    x = inputs.astype(jnp.float32)
    n = x.shape[0]
    sq = jnp.sum(x * x, axis=1, keepdims=True)
    dist = jnp.sqrt(jnp.maximum(sq + sq.T - 2.0 * (x @ x.T), 1e-12))
    pos = targets[:, None] == targets[None, :]
    neg = ~pos
    if use_weight:
        ap_w = jnp.where(pos, jnp.exp(dist - jnp.max(jnp.where(pos, dist, -1e30), 1, keepdims=True)), 0.0)
        dist_ap = jnp.sum(dist * ap_w, 1) / jnp.sum(ap_w, 1)
        an_w = jnp.where(neg, jnp.exp(-dist - jnp.max(jnp.where(neg, -dist, -1e30), 1, keepdims=True)), 0.0)
        dist_an = jnp.sum(dist * an_w, 1) / jnp.sum(an_w, 1)
    else:
        dist_ap = jnp.max(jnp.where(pos, dist, -1e30), 1)
        dist_an = jnp.min(jnp.where(neg, dist, 1e30), 1)
    loss_mat = jnp.maximum(dist_ap - dist_an + margin, 0.0)
    return (jnp.mean(loss_mat),
            jnp.sum(dist_an > dist_ap).astype(jnp.float32) * 100.0 / n,
            jnp.sum(loss_mat > 0.001).astype(jnp.float32),
            jnp.mean(dist_an),
            jnp.mean(dist_ap))


if __name__ == "__main__":
    key = jax.random.PRNGKey(0)
    n, d = 16, 32                       # N = 16 embeddings of dim 32
    inputs = jax.random.normal(key, (n, d), dtype=jnp.float32)
    # PK-sampled labels (4 identities x 4 samples): every row has positives AND
    # negatives, matching the PyTorch .view(n, -1) assumption.
    targets = jnp.repeat(jnp.arange(4, dtype=jnp.int32), 4)

    def check(out, ref):
        for a, b in zip(out, ref):
            a, b = float(a), float(b)
            assert abs(a - b) < 1e-3 + 1e-3 * abs(b), (a, b)

    # 1) forced tile_n=8 -> multi-step accumulate/finalize path
    out = jax.block_until_ready(triplet_loss(inputs, targets, step=0, tile_n=8))
    check(out, _triplet_loss_ref(inputs, targets))

    # 2) default heuristic tile (single-step path here)
    out = jax.block_until_ready(triplet_loss(inputs, targets, step=0))
    check(out, _triplet_loss_ref(inputs, targets))

    # 3) hard max/min (use_weight=False) path
    out = jax.block_until_ready(triplet_loss(inputs, targets, step=0, use_weight=False, tile_n=8))
    check(out, _triplet_loss_ref(inputs, targets, use_weight=False))

    print("KERNEL_OK")
</pallas_src>

<mosaic_0001>
module attributes {stable_mosaic.version = 11 : i64} {
  func.func @_triplet_kernel(%arg0: i32, %arg1: i32, %arg2: memref<16x128xf32, #tpu.memory_space<vmem>>, %arg3: memref<16x1xi32, #tpu.memory_space<vmem>>, %arg4: memref<1x16xi32, #tpu.memory_space<vmem>>, %arg5: memref<1x1x128xf32, #tpu.memory_space<vmem>>, %arg6: memref<1x16xf32, #tpu.memory_space<vmem>>) attributes {dimension_semantics = [#tpu.dimension_semantics<parallel>, #tpu.dimension_semantics<arbitrary>], iteration_bounds = array<i64: 1, 2>, scalar_prefetch = 0 : i64, scratch_operands = 1 : i64, tpu.core_type = #tpu.core_type<tc>, window_params = [{pipeline_mode = #tpu.pipeline_mode<synchronous>, transform_indices = @transform_0, window_bounds = array<i64: 16, 128>}, {pipeline_mode = #tpu.pipeline_mode<synchronous>, transform_indices = @transform_1, window_bounds = array<i64: 16, 1>}, {pipeline_mode = #tpu.pipeline_mode<synchronous>, transform_indices = @transform_2, window_bounds = array<i64: 1, 16>}, {transform_indices = @transform_3, window_bounds = array<i64: 1, 1, 128>}]} {
    %0 = tpu.iota {dimensions = array<i32: 2>} : vector<1x1x128xi32>
    %c0_i32 = arith.constant 0 : i32
    %1 = arith.cmpi eq, %arg1, %c0_i32 : i32
    %2 = arith.extui %1 : i1 to i32
    %c0_i32_0 = arith.constant 0 : i32
    %3 = arith.cmpi ne, %2, %c0_i32_0 : i32
    scf.if %3 {
      %cst_39 = arith.constant 0.000000e+00 : f32
      %128 = vector.broadcast %cst_39 : f32 to vector<1x1x128xf32>
      %c0_40 = arith.constant 0 : index
      %c0_41 = arith.constant 0 : index
      %c0_42 = arith.constant 0 : index
      %129 = vector.load %arg5[%c0_40, %c0_41, %c0_42] : memref<1x1x128xf32, #tpu.memory_space<vmem>>, vector<1x1x128xf32>
      tpu.vector_store %arg5[%c0_40, %c0_41, %c0_42], %128 {strides = array<i32>} : memref<1x1x128xf32, #tpu.memory_space<vmem>>, vector<1x1x128xf32>,
      %cst_43 = arith.constant 0.000000e+00 : f32
      %130 = vector.broadcast %cst_43 : f32 to vector<1x16xf32>
      %c0_44 = arith.constant 0 : index
      %c0_45 = arith.constant 0 : index
      %131 = vector.load %arg6[%c0_44, %c0_45] : memref<1x16xf32, #tpu.memory_space<vmem>>, vector<1x16xf32>
      tpu.vector_store %arg6[%c0_44, %c0_45], %130 {strides = array<i32>} : memref<1x16xf32, #tpu.memory_space<vmem>>, vector<1x16xf32>,
      %cst_46 = arith.constant 1.000000e+00 : f32
      %132 = vector.broadcast %cst_46 : f32 to vector<1x128xf32>
      %c0_i32_47 = arith.constant 0 : i32
      %c128_i32 = arith.constant 128 : i32
      %133 = arith.muli %c0_i32_47, %c128_i32 : i32
      %134 = tpu.assume_multiple %133, 128 : i32
      %c0_48 = arith.constant 0 : index
      %135 = arith.index_cast %134 : i32 to index
      %136 = vector.load %arg2[%c0_48, %135] : memref<16x128xf32, #tpu.memory_space<vmem>>, vector<16x128xf32>
      %137 = arith.mulf %136, %136 : vector<16x128xf32>
      %cst_49 = arith.constant dense<0.000000e+00> : vector<1x16xf32>
      %138 = tpu.matmul %132, %137, %cst_49 {dimension_numbers = #tpu.dot_dimension_numbers<[1], [1], [0], [0], [0, 0, 1, 0], [], []>} : vector<1x128xf32>, vector<16x128xf32>, vector<1x16xf32> -> vector<1x16xf32>
      %c0_50 = arith.constant 0 : index
      %c0_51 = arith.constant 0 : index
      %139 = vector.load %arg6[%c0_50, %c0_51] : memref<1x16xf32, #tpu.memory_space<vmem>>, vector<1x16xf32>
      %140 = arith.addf %139, %138 : vector<1x16xf32>
      %c0_52 = arith.constant 0 : index
      %c0_53 = arith.constant 0 : index
      %141 = vector.load %arg6[%c0_52, %c0_53] : memref<1x16xf32, #tpu.memory_space<vmem>>, vector<1x16xf32>
      tpu.vector_store %arg6[%c0_52, %c0_53], %140 {strides = array<i32>} : memref<1x16xf32, #tpu.memory_space<vmem>>, vector<1x16xf32>,
      %c1_i32_54 = arith.constant 1 : i32
    } else {
    }
    %c2_i32 = arith.constant 2 : i32
    %4 = arith.muli %arg0, %c2_i32 : i32
    %5 = arith.addi %4, %arg1 : i32
    %c8_i32 = arith.constant 8 : i32
    %6 = arith.muli %5, %c8_i32 : i32
    %7 = tpu.assume_multiple %6, 8 : i32
    %8 = arith.index_cast %7 : i32 to index
    %c0 = arith.constant 0 : index
    %9 = vector.load %arg2[%8, %c0] : memref<16x128xf32, #tpu.memory_space<vmem>>, vector<8x128xf32>
    %c0_1 = arith.constant 0 : index
    %c0_2 = arith.constant 0 : index
    %10 = vector.load %arg2[%c0_1, %c0_2] : memref<16x128xf32, #tpu.memory_space<vmem>>, vector<16x128xf32>
    %cst = arith.constant dense<0.000000e+00> : vector<8x16xf32>
    %11 = tpu.matmul %9, %10, %cst {dimension_numbers = #tpu.dot_dimension_numbers<[1], [1], [0], [0], [0, 0, 1, 0], [], []>} : vector<8x128xf32>, vector<16x128xf32>, vector<8x16xf32> -> vector<8x16xf32>
    %12 = arith.mulf %9, %9 : vector<8x128xf32>
    %cst_3 = arith.constant dense<0.000000e+00> : vector<8xf32>
    %13 = vector.multi_reduction <add>, %12, %cst_3 [1] : vector<8x128xf32> to vector<8xf32>
    %14 = vector.shape_cast %13 : vector<8xf32> to vector<8x1xf32>
    %c0_4 = arith.constant 0 : index
    %c0_5 = arith.constant 0 : index
    %15 = vector.load %arg6[%c0_4, %c0_5] : memref<1x16xf32, #tpu.memory_space<vmem>>, vector<1x16xf32>
    %16 = vector.broadcast %14 : vector<8x1xf32> to vector<8x16xf32>
    %17 = vector.broadcast %15 : vector<1x16xf32> to vector<8x16xf32>
    %18 = arith.addf %16, %17 : vector<8x16xf32>
    %cst_6 = arith.constant 2.000000e+00 : f32
    %19 = vector.broadcast %cst_6 : f32 to vector<8x16xf32>
    %20 = arith.mulf %19, %11 : vector<8x16xf32>
    %21 = arith.subf %18, %20 : vector<8x16xf32>
    %cst_7 = arith.constant 9.99999996E-13 : f32
    %22 = vector.broadcast %cst_7 : f32 to vector<8x16xf32>
    %23 = arith.maximumf %21, %22 : vector<8x16xf32>
    %24 = arith.index_cast %7 : i32 to index
    %c0_8 = arith.constant 0 : index
    %25 = vector.load %arg3[%24, %c0_8] : memref<16x1xi32, #tpu.memory_space<vmem>>, vector<8x1xi32>
    %c0_9 = arith.constant 0 : index
    %c0_10 = arith.constant 0 : index
    %26 = vector.load %arg4[%c0_9, %c0_10] : memref<1x16xi32, #tpu.memory_space<vmem>>, vector<1x16xi32>
    %27 = vector.broadcast %25 : vector<8x1xi32> to vector<8x16xi32>
    %28 = vector.broadcast %26 : vector<1x16xi32> to vector<8x16xi32>
    %29 = arith.cmpi eq, %27, %28 : vector<8x16xi32>
    %30 = math.sqrt %23 : vector<8x16xf32>
    %cst_11 = arith.constant -1.000000e+30 : f32
    %31 = vector.broadcast %cst_11 : f32 to vector<8x16xf32>
    %32 = arith.select %29, %30, %31 : vector<8x16xi1>, vector<8x16xf32>
    %cst_12 = arith.constant dense<0xFF800000> : vector<8xf32>
    %33 = vector.multi_reduction <maximumf>, %32, %cst_12 [1] : vector<8x16xf32> to vector<8xf32>
    %34 = vector.shape_cast %33 : vector<8xf32> to vector<8x1xf32>
    %35 = vector.broadcast %34 : vector<8x1xf32> to vector<8x16xf32>
    %36 = arith.subf %32, %35 : vector<8x16xf32>
    %37 = math.exp %36 : vector<8x16xf32>
    %38 = arith.mulf %30, %37 : vector<8x16xf32>
    %cst_13 = arith.constant dense<0.000000e+00> : vector<8xf32>
    %39 = vector.multi_reduction <add>, %38, %cst_13 [1] : vector<8x16xf32> to vector<8xf32>
    %40 = vector.shape_cast %39 : vector<8xf32> to vector<8x1xf32>
    %cst_14 = arith.constant dense<0.000000e+00> : vector<8xf32>
    %41 = vector.multi_reduction <add>, %37, %cst_14 [1] : vector<8x16xf32> to vector<8xf32>
    %42 = vector.shape_cast %41 : vector<8xf32> to vector<8x1xf32>
    %43 = arith.divf %40, %42 : vector<8x1xf32>
    %cst_15 = arith.constant 0.000000e+00 : f32
    %44 = vector.broadcast %cst_15 : f32 to vector<8x16xf32>
    %45 = arith.subf %44, %30 : vector<8x16xf32>
    %cst_16 = arith.constant -1.000000e+30 : f32
    %46 = vector.broadcast %cst_16 : f32 to vector<8x16xf32>
    %47 = arith.select %29, %46, %45 : vector<8x16xi1>, vector<8x16xf32>
    %cst_17 = arith.constant dense<0xFF800000> : vector<8xf32>
    %48 = vector.multi_reduction <maximumf>, %47, %cst_17 [1] : vector<8x16xf32> to vector<8xf32>
    %49 = vector.shape_cast %48 : vector<8xf32> to vector<8x1xf32>
    %50 = vector.broadcast %49 : vector<8x1xf32> to vector<8x16xf32>
    %51 = arith.subf %47, %50 : vector<8x16xf32>
    %52 = math.exp %51 : vector<8x16xf32>
    %53 = arith.mulf %30, %52 : vector<8x16xf32>
    %cst_18 = arith.constant dense<0.000000e+00> : vector<8xf32>
    %54 = vector.multi_reduction <add>, %53, %cst_18 [1] : vector<8x16xf32> to vector<8xf32>
    %55 = vector.shape_cast %54 : vector<8xf32> to vector<8x1xf32>
    %cst_19 = arith.constant dense<0.000000e+00> : vector<8xf32>
    %56 = vector.multi_reduction <add>, %52, %cst_19 [1] : vector<8x16xf32> to vector<8xf32>
    %57 = vector.shape_cast %56 : vector<8xf32> to vector<8x1xf32>
    %58 = arith.divf %55, %57 : vector<8x1xf32>
    %59 = arith.subf %43, %58 : vector<8x1xf32>
    %cst_20 = arith.constant 0.000000e+00 : f32
    %60 = vector.broadcast %cst_20 : f32 to vector<8x1xf32>
    %61 = arith.addf %59, %60 : vector<8x1xf32>
    %cst_21 = arith.constant 0.000000e+00 : f32
    %62 = vector.broadcast %cst_21 : f32 to vector<8x1xf32>
    %63 = arith.maximumf %61, %62 : vector<8x1xf32>
    %64 = vector.shape_cast %63 : vector<8x1xf32> to vector<1x8x1xf32>
    %cst_22 = arith.constant dense<0.000000e+00> : vector<1xf32>
    %65 = vector.multi_reduction <add>, %64, %cst_22 [1, 2] : vector<1x8x1xf32> to vector<1xf32>
    %66 = vector.shape_cast %65 : vector<1xf32> to vector<1x1x1xf32>
    %67 = vector.extract %66[0, 0, 0] : f32 from vector<1x1x1xf32>
    %68 = vector.broadcast %67 : f32 to vector<1x1xf32>
    %69 = arith.cmpf ogt, %58, %43 : vector<8x1xf32>
    %70 = arith.extui %69 : vector<8x1xi1> to vector<8x1xi32>
    %71 = arith.sitofp %70 : vector<8x1xi32> to vector<8x1xf32>
    %72 = vector.shape_cast %71 : vector<8x1xf32> to vector<1x8x1xf32>
    %cst_23 = arith.constant dense<0.000000e+00> : vector<1xf32>
    %73 = vector.multi_reduction <add>, %72, %cst_23 [1, 2] : vector<1x8x1xf32> to vector<1xf32>
    %74 = vector.shape_cast %73 : vector<1xf32> to vector<1x1x1xf32>
    %75 = vector.extract %74[0, 0, 0] : f32 from vector<1x1x1xf32>
    %76 = vector.broadcast %75 : f32 to vector<1x1xf32>
    %cst_24 = arith.constant 1.000000e-03 : f32
    %77 = vector.broadcast %cst_24 : f32 to vector<8x1xf32>
    %78 = arith.cmpf ogt, %63, %77 : vector<8x1xf32>
    %79 = arith.extui %78 : vector<8x1xi1> to vector<8x1xi32>
    %80 = arith.sitofp %79 : vector<8x1xi32> to vector<8x1xf32>
    %81 = vector.shape_cast %80 : vector<8x1xf32> to vector<1x8x1xf32>
    %cst_25 = arith.constant dense<0.000000e+00> : vector<1xf32>
    %82 = vector.multi_reduction <add>, %81, %cst_25 [1, 2] : vector<1x8x1xf32> to vector<1xf32>
    %83 = vector.shape_cast %82 : vector<1xf32> to vector<1x1x1xf32>
    %84 = vector.extract %83[0, 0, 0] : f32 from vector<1x1x1xf32>
    %85 = vector.broadcast %84 : f32 to vector<1x1xf32>
    %86 = vector.shape_cast %58 : vector<8x1xf32> to vector<1x8x1xf32>
    %cst_26 = arith.constant dense<0.000000e+00> : vector<1xf32>
    %87 = vector.multi_reduction <add>, %86, %cst_26 [1, 2] : vector<1x8x1xf32> to vector<1xf32>
    %88 = vector.shape_cast %87 : vector<1xf32> to vector<1x1x1xf32>
    %89 = vector.extract %88[0, 0, 0] : f32 from vector<1x1x1xf32>
    %90 = vector.broadcast %89 : f32 to vector<1x1xf32>
    %91 = vector.shape_cast %43 : vector<8x1xf32> to vector<1x8x1xf32>
    %cst_27 = arith.constant dense<0.000000e+00> : vector<1xf32>
    %92 = vector.multi_reduction <add>, %91, %cst_27 [1, 2] : vector<1x8x1xf32> to vector<1xf32>
    %93 = vector.shape_cast %92 : vector<1xf32> to vector<1x1x1xf32>
    %94 = vector.extract %93[0, 0, 0] : f32 from vector<1x1x1xf32>
    %95 = vector.broadcast %94 : f32 to vector<1x1xf32>
    %c0_i32_28 = arith.constant 0 : i32
    %96 = vector.broadcast %c0_i32_28 : i32 to vector<1x1x128xi32>
    %97 = arith.cmpi eq, %0, %96 : vector<1x1x128xi32>
    %cst_29 = arith.constant 0.000000e+00 : f32
    %98 = vector.shape_cast %68 : vector<1x1xf32> to vector<1x1x1xf32>
    %99 = vector.broadcast %98 : vector<1x1x1xf32> to vector<1x1x128xf32>
    %100 = vector.broadcast %cst_29 : f32 to vector<1x1x128xf32>
    %101 = arith.select %97, %99, %100 : vector<1x1x128xi1>, vector<1x1x128xf32>
    %c1_i32 = arith.constant 1 : i32
    %102 = vector.broadcast %c1_i32 : i32 to vector<1x1x128xi32>
    %103 = arith.cmpi eq, %0, %102 : vector<1x1x128xi32>
    %104 = vector.shape_cast %76 : vector<1x1xf32> to vector<1x1x1xf32>
    %105 = vector.broadcast %104 : vector<1x1x1xf32> to vector<1x1x128xf32>
    %106 = arith.select %103, %105, %101 : vector<1x1x128xi1>, vector<1x1x128xf32>
    %c2_i32_30 = arith.constant 2 : i32
    %107 = vector.broadcast %c2_i32_30 : i32 to vector<1x1x128xi32>
    %108 = arith.cmpi eq, %0, %107 : vector<1x1x128xi32>
    %109 = vector.shape_cast %85 : vector<1x1xf32> to vector<1x1x1xf32>
    %110 = vector.broadcast %109 : vector<1x1x1xf32> to vector<1x1x128xf32>
    %111 = arith.select %108, %110, %106 : vector<1x1x128xi1>, vector<1x1x128xf32>
    %c3_i32 = arith.constant 3 : i32
    %112 = vector.broadcast %c3_i32 : i32 to vector<1x1x128xi32>
    %113 = arith.cmpi eq, %0, %112 : vector<1x1x128xi32>
    %114 = vector.shape_cast %90 : vector<1x1xf32> to vector<1x1x1xf32>
    %115 = vector.broadcast %114 : vector<1x1x1xf32> to vector<1x1x128xf32>
    %116 = arith.select %113, %115, %111 : vector<1x1x128xi1>, vector<1x1x128xf32>
    %c4_i32 = arith.constant 4 : i32
    %117 = vector.broadcast %c4_i32 : i32 to vector<1x1x128xi32>
    %118 = arith.cmpi eq, %0, %117 : vector<1x1x128xi32>
    %119 = vector.shape_cast %95 : vector<1x1xf32> to vector<1x1x1xf32>
    %120 = vector.broadcast %119 : vector<1x1x1xf32> to vector<1x1x128xf32>
    %121 = arith.select %118, %120, %116 : vector<1x1x128xi1>, vector<1x1x128xf32>
    %c0_31 = arith.constant 0 : index
    %c0_32 = arith.constant 0 : index
    %c0_33 = arith.constant 0 : index
    %122 = vector.load %arg5[%c0_31, %c0_32, %c0_33] : memref<1x1x128xf32, #tpu.memory_space<vmem>>, vector<1x1x128xf32>
    %123 = arith.addf %122, %121 : vector<1x1x128xf32>
    %c0_34 = arith.constant 0 : index
    %c0_35 = arith.constant 0 : index
    %c0_36 = arith.constant 0 : index
    %124 = vector.load %arg5[%c0_34, %c0_35, %c0_36] : memref<1x1x128xf32, #tpu.memory_space<vmem>>, vector<1x1x128xf32>
    tpu.vector_store %arg5[%c0_34, %c0_35, %c0_36], %123 {strides = array<i32>} : memref<1x1x128xf32, #tpu.memory_space<vmem>>, vector<1x1x128xf32>,
    %c1_i32_37 = arith.constant 1 : i32
    %125 = arith.cmpi eq, %arg1, %c1_i32_37 : i32
    %126 = arith.extui %125 : i1 to i32
    %c0_i32_38 = arith.constant 0 : i32
    %127 = arith.cmpi ne, %126, %c0_i32_38 : i32
    scf.if %127 {
      %c1_i32_39 = arith.constant 1 : i32
      %128 = vector.broadcast %c1_i32_39 : i32 to vector<1x1x128xi32>
      %129 = arith.cmpi eq, %0, %128 : vector<1x1x128xi32>
      %c2_i32_40 = arith.constant 2 : i32
      %130 = vector.broadcast %c2_i32_40 : i32 to vector<1x1x128xi32>
      %131 = arith.cmpi eq, %0, %130 : vector<1x1x128xi32>
      %cst_41 = arith.constant 1.000000e+00 : f32
      %cst_42 = arith.constant 6.250000e-02 : f32
      %132 = vector.broadcast %cst_41 : f32 to vector<1x1x128xf32>
      %133 = vector.broadcast %cst_42 : f32 to vector<1x1x128xf32>
      %134 = arith.select %131, %132, %133 : vector<1x1x128xi1>, vector<1x1x128xf32>
      %cst_43 = arith.constant 6.250000e+00 : f32
      %135 = vector.broadcast %cst_43 : f32 to vector<1x1x128xf32>
      %136 = arith.select %129, %135, %134 : vector<1x1x128xi1>, vector<1x1x128xf32>
      %c0_44 = arith.constant 0 : index
      %c0_45 = arith.constant 0 : index
      %c0_46 = arith.constant 0 : index
      %137 = vector.load %arg5[%c0_44, %c0_45, %c0_46] : memref<1x1x128xf32, #tpu.memory_space<vmem>>, vector<1x1x128xf32>
      %138 = arith.mulf %137, %136 : vector<1x1x128xf32>
      %c0_47 = arith.constant 0 : index
      %c0_48 = arith.constant 0 : index
      %c0_49 = arith.constant 0 : index
      %139 = vector.load %arg5[%c0_47, %c0_48, %c0_49] : memref<1x1x128xf32, #tpu.memory_space<vmem>>, vector<1x1x128xf32>
      tpu.vector_store %arg5[%c0_47, %c0_48, %c0_49], %138 {strides = array<i32>} : memref<1x1x128xf32, #tpu.memory_space<vmem>>, vector<1x1x128xf32>,
    } else {
    }
    return
  }
  func.func @transform_0(%arg0: i32, %arg1: i32) -> (i32, i32) {
    %c0_i32 = arith.constant 0 : i32
    %c0_i32_0 = arith.constant 0 : i32
    %c0_i32_1 = arith.constant 0 : i32
    return %c0_i32, %c0_i32_0 : i32, i32
  }
  func.func @transform_1(%arg0: i32, %arg1: i32) -> (i32, i32) {
    %c0_i32 = arith.constant 0 : i32
    %c0_i32_0 = arith.constant 0 : i32
    %c0_i32_1 = arith.constant 0 : i32
    return %c0_i32, %c0_i32_0 : i32, i32
  }
  func.func @transform_2(%arg0: i32, %arg1: i32) -> (i32, i32) {
    %c0_i32 = arith.constant 0 : i32
    %c0_i32_0 = arith.constant 0 : i32
    %c0_i32_1 = arith.constant 0 : i32
    return %c0_i32, %c0_i32_0 : i32, i32
  }
  func.func @transform_3(%arg0: i32, %arg1: i32) -> (i32, i32, i32) {
    %c0_i32 = arith.constant 0 : i32
    %c0_i32_0 = arith.constant 0 : i32
    %c0_i32_1 = arith.constant 0 : i32
    return %arg0, %c0_i32, %c0_i32_0 : i32, i32, i32
  }
}

module attributes {stable_mosaic.version = 11 : i64} {
  func.func @_triplet_kernel(%arg0: i32, %arg1: i32, %arg2: memref<16x128xf32, #tpu.memory_space<vmem>>, %arg3: memref<16x1xi32, #tpu.memory_space<vmem>>, %arg4: memref<1x16xi32, #tpu.memory_space<vmem>>, %arg5: memref<1x1x128xf32, #tpu.memory_space<vmem>>, %arg6: memref<1x16xf32, #tpu.memory_space<vmem>>) attributes {dimension_semantics = [#tpu.dimension_semantics<parallel>, #tpu.dimension_semantics<arbitrary>], iteration_bounds = array<i64: 1, 2>, scalar_prefetch = 0 : i64, scratch_operands = 1 : i64, tpu.core_type = #tpu.core_type<tc>, window_params = [{pipeline_mode = #tpu.pipeline_mode<synchronous>, transform_indices = @transform_0, window_bounds = array<i64: 16, 128>}, {pipeline_mode = #tpu.pipeline_mode<synchronous>, transform_indices = @transform_1, window_bounds = array<i64: 16, 1>}, {pipeline_mode = #tpu.pipeline_mode<synchronous>, transform_indices = @transform_2, window_bounds = array<i64: 1, 16>}, {transform_indices = @transform_3, window_bounds = array<i64: 1, 1, 128>}]} {
    %0 = tpu.iota {dimensions = array<i32: 2>} : vector<1x1x128xi32>
    %c0_i32 = arith.constant 0 : i32
    %1 = arith.cmpi eq, %arg1, %c0_i32 : i32
    %2 = arith.extui %1 : i1 to i32
    %c0_i32_0 = arith.constant 0 : i32
    %3 = arith.cmpi ne, %2, %c0_i32_0 : i32
    scf.if %3 {
      %cst_39 = arith.constant 0.000000e+00 : f32
      %128 = vector.broadcast %cst_39 : f32 to vector<1x1x128xf32>
      %c0_40 = arith.constant 0 : index
      %c0_41 = arith.constant 0 : index
      %c0_42 = arith.constant 0 : index
      %129 = vector.load %arg5[%c0_40, %c0_41, %c0_42] : memref<1x1x128xf32, #tpu.memory_space<vmem>>, vector<1x1x128xf32>
      tpu.vector_store %arg5[%c0_40, %c0_41, %c0_42], %128 {strides = array<i32>} : memref<1x1x128xf32, #tpu.memory_space<vmem>>, vector<1x1x128xf32>,
      %cst_43 = arith.constant 0.000000e+00 : f32
      %130 = vector.broadcast %cst_43 : f32 to vector<1x16xf32>
      %c0_44 = arith.constant 0 : index
      %c0_45 = arith.constant 0 : index
      %131 = vector.load %arg6[%c0_44, %c0_45] : memref<1x16xf32, #tpu.memory_space<vmem>>, vector<1x16xf32>
      tpu.vector_store %arg6[%c0_44, %c0_45], %130 {strides = array<i32>} : memref<1x16xf32, #tpu.memory_space<vmem>>, vector<1x16xf32>,
      %cst_46 = arith.constant 1.000000e+00 : f32
      %132 = vector.broadcast %cst_46 : f32 to vector<1x128xf32>
      %c0_i32_47 = arith.constant 0 : i32
      %c128_i32 = arith.constant 128 : i32
      %133 = arith.muli %c0_i32_47, %c128_i32 : i32
      %134 = tpu.assume_multiple %133, 128 : i32
      %c0_48 = arith.constant 0 : index
      %135 = arith.index_cast %134 : i32 to index
      %136 = vector.load %arg2[%c0_48, %135] : memref<16x128xf32, #tpu.memory_space<vmem>>, vector<16x128xf32>
      %137 = arith.mulf %136, %136 : vector<16x128xf32>
      %cst_49 = arith.constant dense<0.000000e+00> : vector<1x16xf32>
      %138 = tpu.matmul %132, %137, %cst_49 {dimension_numbers = #tpu.dot_dimension_numbers<[1], [1], [0], [0], [0, 0, 1, 0], [], []>} : vector<1x128xf32>, vector<16x128xf32>, vector<1x16xf32> -> vector<1x16xf32>
      %c0_50 = arith.constant 0 : index
      %c0_51 = arith.constant 0 : index
      %139 = vector.load %arg6[%c0_50, %c0_51] : memref<1x16xf32, #tpu.memory_space<vmem>>, vector<1x16xf32>
      %140 = arith.addf %139, %138 : vector<1x16xf32>
      %c0_52 = arith.constant 0 : index
      %c0_53 = arith.constant 0 : index
      %141 = vector.load %arg6[%c0_52, %c0_53] : memref<1x16xf32, #tpu.memory_space<vmem>>, vector<1x16xf32>
      tpu.vector_store %arg6[%c0_52, %c0_53], %140 {strides = array<i32>} : memref<1x16xf32, #tpu.memory_space<vmem>>, vector<1x16xf32>,
      %c1_i32_54 = arith.constant 1 : i32
    } else {
    }
    %c2_i32 = arith.constant 2 : i32
    %4 = arith.muli %arg0, %c2_i32 : i32
    %5 = arith.addi %4, %arg1 : i32
    %c8_i32 = arith.constant 8 : i32
    %6 = arith.muli %5, %c8_i32 : i32
    %7 = tpu.assume_multiple %6, 8 : i32
    %8 = arith.index_cast %7 : i32 to index
    %c0 = arith.constant 0 : index
    %9 = vector.load %arg2[%8, %c0] : memref<16x128xf32, #tpu.memory_space<vmem>>, vector<8x128xf32>
    %c0_1 = arith.constant 0 : index
    %c0_2 = arith.constant 0 : index
    %10 = vector.load %arg2[%c0_1, %c0_2] : memref<16x128xf32, #tpu.memory_space<vmem>>, vector<16x128xf32>
    %cst = arith.constant dense<0.000000e+00> : vector<8x16xf32>
    %11 = tpu.matmul %9, %10, %cst {dimension_numbers = #tpu.dot_dimension_numbers<[1], [1], [0], [0], [0, 0, 1, 0], [], []>} : vector<8x128xf32>, vector<16x128xf32>, vector<8x16xf32> -> vector<8x16xf32>
    %12 = arith.mulf %9, %9 : vector<8x128xf32>
    %cst_3 = arith.constant dense<0.000000e+00> : vector<8xf32>
    %13 = vector.multi_reduction <add>, %12, %cst_3 [1] : vector<8x128xf32> to vector<8xf32>
    %14 = vector.shape_cast %13 : vector<8xf32> to vector<8x1xf32>
    %c0_4 = arith.constant 0 : index
    %c0_5 = arith.constant 0 : index
    %15 = vector.load %arg6[%c0_4, %c0_5] : memref<1x16xf32, #tpu.memory_space<vmem>>, vector<1x16xf32>
    %16 = vector.broadcast %14 : vector<8x1xf32> to vector<8x16xf32>
    %17 = vector.broadcast %15 : vector<1x16xf32> to vector<8x16xf32>
    %18 = arith.addf %16, %17 : vector<8x16xf32>
    %cst_6 = arith.constant 2.000000e+00 : f32
    %19 = vector.broadcast %cst_6 : f32 to vector<8x16xf32>
    %20 = arith.mulf %19, %11 : vector<8x16xf32>
    %21 = arith.subf %18, %20 : vector<8x16xf32>
    %cst_7 = arith.constant 9.99999996E-13 : f32
    %22 = vector.broadcast %cst_7 : f32 to vector<8x16xf32>
    %23 = arith.maximumf %21, %22 : vector<8x16xf32>
    %24 = arith.index_cast %7 : i32 to index
    %c0_8 = arith.constant 0 : index
    %25 = vector.load %arg3[%24, %c0_8] : memref<16x1xi32, #tpu.memory_space<vmem>>, vector<8x1xi32>
    %c0_9 = arith.constant 0 : index
    %c0_10 = arith.constant 0 : index
    %26 = vector.load %arg4[%c0_9, %c0_10] : memref<1x16xi32, #tpu.memory_space<vmem>>, vector<1x16xi32>
    %27 = vector.broadcast %25 : vector<8x1xi32> to vector<8x16xi32>
    %28 = vector.broadcast %26 : vector<1x16xi32> to vector<8x16xi32>
    %29 = arith.cmpi eq, %27, %28 : vector<8x16xi32>
    %30 = math.sqrt %23 : vector<8x16xf32>
    %cst_11 = arith.constant -1.000000e+30 : f32
    %31 = vector.broadcast %cst_11 : f32 to vector<8x16xf32>
    %32 = arith.select %29, %30, %31 : vector<8x16xi1>, vector<8x16xf32>
    %cst_12 = arith.constant dense<0xFF800000> : vector<8xf32>
    %33 = vector.multi_reduction <maximumf>, %32, %cst_12 [1] : vector<8x16xf32> to vector<8xf32>
    %34 = vector.shape_cast %33 : vector<8xf32> to vector<8x1xf32>
    %35 = vector.broadcast %34 : vector<8x1xf32> to vector<8x16xf32>
    %36 = arith.subf %32, %35 : vector<8x16xf32>
    %37 = math.exp %36 : vector<8x16xf32>
    %38 = arith.mulf %30, %37 : vector<8x16xf32>
    %cst_13 = arith.constant dense<0.000000e+00> : vector<8xf32>
    %39 = vector.multi_reduction <add>, %38, %cst_13 [1] : vector<8x16xf32> to vector<8xf32>
    %40 = vector.shape_cast %39 : vector<8xf32> to vector<8x1xf32>
    %cst_14 = arith.constant dense<0.000000e+00> : vector<8xf32>
    %41 = vector.multi_reduction <add>, %37, %cst_14 [1] : vector<8x16xf32> to vector<8xf32>
    %42 = vector.shape_cast %41 : vector<8xf32> to vector<8x1xf32>
    %43 = arith.divf %40, %42 : vector<8x1xf32>
    %cst_15 = arith.constant 0.000000e+00 : f32
    %44 = vector.broadcast %cst_15 : f32 to vector<8x16xf32>
    %45 = arith.subf %44, %30 : vector<8x16xf32>
    %cst_16 = arith.constant -1.000000e+30 : f32
    %46 = vector.broadcast %cst_16 : f32 to vector<8x16xf32>
    %47 = arith.select %29, %46, %45 : vector<8x16xi1>, vector<8x16xf32>
    %cst_17 = arith.constant dense<0xFF800000> : vector<8xf32>
    %48 = vector.multi_reduction <maximumf>, %47, %cst_17 [1] : vector<8x16xf32> to vector<8xf32>
    %49 = vector.shape_cast %48 : vector<8xf32> to vector<8x1xf32>
    %50 = vector.broadcast %49 : vector<8x1xf32> to vector<8x16xf32>
    %51 = arith.subf %47, %50 : vector<8x16xf32>
    %52 = math.exp %51 : vector<8x16xf32>
    %53 = arith.mulf %30, %52 : vector<8x16xf32>
    %cst_18 = arith.constant dense<0.000000e+00> : vector<8xf32>
    %54 = vector.multi_reduction <add>, %53, %cst_18 [1] : vector<8x16xf32> to vector<8xf32>
    %55 = vector.shape_cast %54 : vector<8xf32> to vector<8x1xf32>
    %cst_19 = arith.constant dense<0.000000e+00> : vector<8xf32>
    %56 = vector.multi_reduction <add>, %52, %cst_19 [1] : vector<8x16xf32> to vector<8xf32>
    %57 = vector.shape_cast %56 : vector<8xf32> to vector<8x1xf32>
    %58 = arith.divf %55, %57 : vector<8x1xf32>
    %59 = arith.subf %43, %58 : vector<8x1xf32>
    %cst_20 = arith.constant 0.000000e+00 : f32
    %60 = vector.broadcast %cst_20 : f32 to vector<8x1xf32>
    %61 = arith.addf %59, %60 : vector<8x1xf32>
    %cst_21 = arith.constant 0.000000e+00 : f32
    %62 = vector.broadcast %cst_21 : f32 to vector<8x1xf32>
    %63 = arith.maximumf %61, %62 : vector<8x1xf32>
    %64 = vector.shape_cast %63 : vector<8x1xf32> to vector<1x8x1xf32>
    %cst_22 = arith.constant dense<0.000000e+00> : vector<1xf32>
    %65 = vector.multi_reduction <add>, %64, %cst_22 [1, 2] : vector<1x8x1xf32> to vector<1xf32>
    %66 = vector.shape_cast %65 : vector<1xf32> to vector<1x1x1xf32>
    %67 = vector.extract %66[0, 0, 0] : f32 from vector<1x1x1xf32>
    %68 = vector.broadcast %67 : f32 to vector<1x1xf32>
    %69 = arith.cmpf ogt, %58, %43 : vector<8x1xf32>
    %70 = arith.extui %69 : vector<8x1xi1> to vector<8x1xi32>
    %71 = arith.sitofp %70 : vector<8x1xi32> to vector<8x1xf32>
    %72 = vector.shape_cast %71 : vector<8x1xf32> to vector<1x8x1xf32>
    %cst_23 = arith.constant dense<0.000000e+00> : vector<1xf32>
    %73 = vector.multi_reduction <add>, %72, %cst_23 [1, 2] : vector<1x8x1xf32> to vector<1xf32>
    %74 = vector.shape_cast %73 : vector<1xf32> to vector<1x1x1xf32>
    %75 = vector.extract %74[0, 0, 0] : f32 from vector<1x1x1xf32>
    %76 = vector.broadcast %75 : f32 to vector<1x1xf32>
    %cst_24 = arith.constant 1.000000e-03 : f32
    %77 = vector.broadcast %cst_24 : f32 to vector<8x1xf32>
    %78 = arith.cmpf ogt, %63, %77 : vector<8x1xf32>
    %79 = arith.extui %78 : vector<8x1xi1> to vector<8x1xi32>
    %80 = arith.sitofp %79 : vector<8x1xi32> to vector<8x1xf32>
    %81 = vector.shape_cast %80 : vector<8x1xf32> to vector<1x8x1xf32>
    %cst_25 = arith.constant dense<0.000000e+00> : vector<1xf32>
    %82 = vector.multi_reduction <add>, %81, %cst_25 [1, 2] : vector<1x8x1xf32> to vector<1xf32>
    %83 = vector.shape_cast %82 : vector<1xf32> to vector<1x1x1xf32>
    %84 = vector.extract %83[0, 0, 0] : f32 from vector<1x1x1xf32>
    %85 = vector.broadcast %84 : f32 to vector<1x1xf32>
    %86 = vector.shape_cast %58 : vector<8x1xf32> to vector<1x8x1xf32>
    %cst_26 = arith.constant dense<0.000000e+00> : vector<1xf32>
    %87 = vector.multi_reduction <add>, %86, %cst_26 [1, 2] : vector<1x8x1xf32> to vector<1xf32>
    %88 = vector.shape_cast %87 : vector<1xf32> to vector<1x1x1xf32>
    %89 = vector.extract %88[0, 0, 0] : f32 from vector<1x1x1xf32>
    %90 = vector.broadcast %89 : f32 to vector<1x1xf32>
    %91 = vector.shape_cast %43 : vector<8x1xf32> to vector<1x8x1xf32>
    %cst_27 = arith.constant dense<0.000000e+00> : vector<1xf32>
    %92 = vector.multi_reduction <add>, %91, %cst_27 [1, 2] : vector<1x8x1xf32> to vector<1xf32>
    %93 = vector.shape_cast %92 : vector<1xf32> to vector<1x1x1xf32>
    %94 = vector.extract %93[0, 0, 0] : f32 from vector<1x1x1xf32>
    %95 = vector.broadcast %94 : f32 to vector<1x1xf32>
    %c0_i32_28 = arith.constant 0 : i32
    %96 = vector.broadcast %c0_i32_28 : i32 to vector<1x1x128xi32>
    %97 = arith.cmpi eq, %0, %96 : vector<1x1x128xi32>
    %cst_29 = arith.constant 0.000000e+00 : f32
    %98 = vector.shape_cast %68 : vector<1x1xf32> to vector<1x1x1xf32>
    %99 = vector.broadcast %98 : vector<1x1x1xf32> to vector<1x1x128xf32>
    %100 = vector.broadcast %cst_29 : f32 to vector<1x1x128xf32>
    %101 = arith.select %97, %99, %100 : vector<1x1x128xi1>, vector<1x1x128xf32>
    %c1_i32 = arith.constant 1 : i32
    %102 = vector.broadcast %c1_i32 : i32 to vector<1x1x128xi32>
    %103 = arith.cmpi eq, %0, %102 : vector<1x1x128xi32>
    %104 = vector.shape_cast %76 : vector<1x1xf32> to vector<1x1x1xf32>
    %105 = vector.broadcast %104 : vector<1x1x1xf32> to vector<1x1x128xf32>
    %106 = arith.select %103, %105, %101 : vector<1x1x128xi1>, vector<1x1x128xf32>
    %c2_i32_30 = arith.constant 2 : i32
    %107 = vector.broadcast %c2_i32_30 : i32 to vector<1x1x128xi32>
    %108 = arith.cmpi eq, %0, %107 : vector<1x1x128xi32>
    %109 = vector.shape_cast %85 : vector<1x1xf32> to vector<1x1x1xf32>
    %110 = vector.broadcast %109 : vector<1x1x1xf32> to vector<1x1x128xf32>
    %111 = arith.select %108, %110, %106 : vector<1x1x128xi1>, vector<1x1x128xf32>
    %c3_i32 = arith.constant 3 : i32
    %112 = vector.broadcast %c3_i32 : i32 to vector<1x1x128xi32>
    %113 = arith.cmpi eq, %0, %112 : vector<1x1x128xi32>
    %114 = vector.shape_cast %90 : vector<1x1xf32> to vector<1x1x1xf32>
    %115 = vector.broadcast %114 : vector<1x1x1xf32> to vector<1x1x128xf32>
    %116 = arith.select %113, %115, %111 : vector<1x1x128xi1>, vector<1x1x128xf32>
    %c4_i32 = arith.constant 4 : i32
    %117 = vector.broadcast %c4_i32 : i32 to vector<1x1x128xi32>
    %118 = arith.cmpi eq, %0, %117 : vector<1x1x128xi32>
    %119 = vector.shape_cast %95 : vector<1x1xf32> to vector<1x1x1xf32>
    %120 = vector.broadcast %119 : vector<1x1x1xf32> to vector<1x1x128xf32>
    %121 = arith.select %118, %120, %116 : vector<1x1x128xi1>, vector<1x1x128xf32>
    %c0_31 = arith.constant 0 : index
    %c0_32 = arith.constant 0 : index
    %c0_33 = arith.constant 0 : index
    %122 = vector.load %arg5[%c0_31, %c0_32, %c0_33] : memref<1x1x128xf32, #tpu.memory_space<vmem>>, vector<1x1x128xf32>
    %123 = arith.addf %122, %121 : vector<1x1x128xf32>
    %c0_34 = arith.constant 0 : index
    %c0_35 = arith.constant 0 : index
    %c0_36 = arith.constant 0 : index
    %124 = vector.load %arg5[%c0_34, %c0_35, %c0_36] : memref<1x1x128xf32, #tpu.memory_space<vmem>>, vector<1x1x128xf32>
    tpu.vector_store %arg5[%c0_34, %c0_35, %c0_36], %123 {strides = array<i32>} : memref<1x1x128xf32, #tpu.memory_space<vmem>>, vector<1x1x128xf32>,
    %c1_i32_37 = arith.constant 1 : i32
    %125 = arith.cmpi eq, %arg1, %c1_i32_37 : i32
    %126 = arith.extui %125 : i1 to i32
    %c0_i32_38 = arith.constant 0 : i32
    %127 = arith.cmpi ne, %126, %c0_i32_38 : i32
    scf.if %127 {
      %c1_i32_39 = arith.constant 1 : i32
      %128 = vector.broadcast %c1_i32_39 : i32 to vector<1x1x128xi32>
      %129 = arith.cmpi eq, %0, %128 : vector<1x1x128xi32>
      %c2_i32_40 = arith.constant 2 : i32
      %130 = vector.broadcast %c2_i32_40 : i32 to vector<1x1x128xi32>
      %131 = arith.cmpi eq, %0, %130 : vector<1x1x128xi32>
      %cst_41 = arith.constant 1.000000e+00 : f32
      %cst_42 = arith.constant 6.250000e-02 : f32
      %132 = vector.broadcast %cst_41 : f32 to vector<1x1x128xf32>
      %133 = vector.broadcast %cst_42 : f32 to vector<1x1x128xf32>
      %134 = arith.select %131, %132, %133 : vector<1x1x128xi1>, vector<1x1x128xf32>
      %cst_43 = arith.constant 6.250000e+00 : f32
      %135 = vector.broadcast %cst_43 : f32 to vector<1x1x128xf32>
      %136 = arith.select %129, %135, %134 : vector<1x1x128xi1>, vector<1x1x128xf32>
      %c0_44 = arith.constant 0 : index
      %c0_45 = arith.constant 0 : index
      %c0_46 = arith.constant 0 : index
      %137 = vector.load %arg5[%c0_44, %c0_45, %c0_46] : memref<1x1x128xf32, #tpu.memory_space<vmem>>, vector<1x1x128xf32>
      %138 = arith.mulf %137, %136 : vector<1x1x128xf32>
      %c0_47 = arith.constant 0 : index
      %c0_48 = arith.constant 0 : index
      %c0_49 = arith.constant 0 : index
      %139 = vector.load %arg5[%c0_47, %c0_48, %c0_49] : memref<1x1x128xf32, #tpu.memory_space<vmem>>, vector<1x1x128xf32>
      tpu.vector_store %arg5[%c0_47, %c0_48, %c0_49], %138 {strides = array<i32>} : memref<1x1x128xf32, #tpu.memory_space<vmem>>, vector<1x1x128xf32>,
    } else {
    }
    return
  }
  func.func @transform_0(%arg0: i32, %arg1: i32) -> (i32, i32) {
    %c0_i32 = arith.constant 0 : i32
    %c0_i32_0 = arith.constant 0 : i32
    %c0_i32_1 = arith.constant 0 : i32
    return %c0_i32, %c0_i32_0 : i32, i32
  }
  func.func @transform_1(%arg0: i32, %arg1: i32) -> (i32, i32) {
    %c0_i32 = arith.constant 0 : i32
    %c0_i32_0 = arith.constant 0 : i32
    %c0_i32_1 = arith.constant 0 : i32
    return %c0_i32, %c0_i32_0 : i32, i32
  }
  func.func @transform_2(%arg0: i32, %arg1: i32) -> (i32, i32) {
    %c0_i32 = arith.constant 0 : i32
    %c0_i32_0 = arith.constant 0 : i32
    %c0_i32_1 = arith.constant 0 : i32
    return %c0_i32, %c0_i32_0 : i32, i32
  }
  func.func @transform_3(%arg0: i32, %arg1: i32) -> (i32, i32, i32) {
    %c0_i32 = arith.constant 0 : i32
    %c0_i32_0 = arith.constant 0 : i32
    %c0_i32_1 = arith.constant 0 : i32
    return %arg0, %c0_i32, %c0_i32_0 : i32, i32, i32
  }
}

</mosaic_0001>

<llo_original>
// kernel: tpu_custom_call.1
$region0: #{tpu_custom_call.1}
  #allocation0 [shape = 'u32[]', space=smem, size = 0x4, offset = 0x4, fixed_abs, tag = 'smem constant byte address 0x4 - core index']
  #allocation1 [shape = 'u32[144,128]{1,0:T(1,128)}', space=vmem, size = 0x12000, scoped, tag = 'internal scratch']
  #allocation2 [shape = 'f32[1,16]{1,0:T(1,128)}', space=vmem, size = 0x200, scoped, tag = 'scratch operand']
  %s0 = inlined_call_operand.hbm [shape: f32[16,128], index: 0, kind: input, shape index: {}]
  %s1 = inlined_call_operand.hbm [shape: s32[16,1], index: 1, kind: input, shape index: {}]
  %s2 = inlined_call_operand.hbm [shape: s32[1,16], index: 2, kind: input, shape index: {}]
  %s3 = inlined_call_operand.hbm [shape: f32[1,1,128], index: 3, kind: output, shape index: {}]
  %s4 = sld [smem:[#allocation0]]
  $region65: #{tpu_custom_call.1} parent=0
    _
  %s6 = ssub.s32 1, %s4
  %s7 = scalar_select 0, %s6, %s4
  $region1: #{tpu_custom_call.1} parent=0
    #allocation3 [shape = 'u8[8192]{0}', space=vmem, size = 0x2000, scoped, tag = 'input window, operand 0, single buffered']
    #allocation4 [shape = 's32[2]{0}', space=sflag, size = 0x8, scoped, tag = 'scoped memory for tpu_custom_call.1']
    #allocation5 [shape = 's32[2]{0}', space=sflag, size = 0x8, scoped, tag = 'scoped memory for tpu_custom_call.1']
    #allocation6 [shape = 'u8[8192]{0}', space=vmem, size = 0x2000, scoped, tag = 'input window, operand 1, single buffered']
    #allocation7 [shape = 's32[1]{0}', space=sflag, size = 0x4, scoped, tag = 'scoped memory for tpu_custom_call.1']
    #allocation8 [shape = 'u8[512]{0}', space=vmem, size = 0x400, scoped, tag = 'input window, operand 2, single buffered']
    #allocation9 [shape = 'u8[512]{0}', space=vmem, size = 0x400, scoped, tag = 'output window, operand 0, single buffered']
    %8 = vsyncpa [#allocation4], 0
    %9 = vsyncpa [#allocation7], 0
    %10 = vsyncpa [#allocation5], 0
    loop: start=0, step=1, limit=4
    $region2: #{tpu_custom_call.1} parent=1 // loop_pre_header
      _
    $region3: #{tpu_custom_call.1} parent=1 // loop_header
      %s12 = sphi 0, %s16
      %p13 = scmp.ge.s32.totalorder %s12, 4
      %s19 = sphi 0, %s31
      %s20 = sphi 0, %s27
      %s21 = sphi 0, %s19
      %s22 = sphi 0, %s20
      %s23 = sphi 0, %s21
      %s24 = sphi 0, %s22
      %s32 = sphi 0, %s32
      %s34 = sphi 0, %s32
      %s35 = sphi 0, %s34
      %s49 = sphi 0, %s35
      %s53 = sphi 0, %s53
      %s55 = sphi 0, %s53
      %s56 = sphi 0, %s55
      %s70 = sphi 0, %s56
      %s74 = sphi 0, %s74
      %s76 = sphi 0, %s74
      %s77 = sphi 0, %s76
      %s91 = sphi 0, %s77
      %s97 = sphi 0, %s99
      %s100 = sphi 0, %s97
      %s101 = sphi 0, %s100
      %s117 = sphi 0, %s101
    $region4: #{tpu_custom_call.1} parent=1 // loop_header_branch
      %15 = sbr.rel (%p13) target = $region8
    $region5: #{tpu_custom_call.1} parent=1 // loop_body
      %s17 = ssub.s32 %s12, 1
      %s18 = ssub.s32 %s12, 2
      %s25 = sadd.s32 1, %s20
      %p26 = scmp.ge.s32.totalorder %s25, 2
      %s27 = scalar_select %p26, 0, %s25
      %s28 = sadd.s32 1, %s19
      %s29 = scalar_select %p26, %s28, %s19
      %p30 = scmp.ge.s32.totalorder %s29, 1
      %s31 = scalar_select %p30, 0, %s29
      %s33 = sadd.s32 %s32, 1
      %p36 = scmp.eq.s32.totalorder %s12, 1
      %p37 = scmp.ne.s32.totalorder %s32, %s34
      %p38 = scmp.eq.s32.totalorder %s12, 0
      %p39 = por %p37, %p38
      %p40 = scmp.ne.s32.totalorder %s32, %s34
      %p41 = scmp.eq.s32.totalorder %s17, 1
      %p42 = por %p40, %p41
      %p43 = scmp.ne.s32.totalorder %s34, %s35
      %p44 = scmp.eq.s32.totalorder %s17, 0
      %p45 = por %p43, %p44
      %p46 = scmp.ne.s32.totalorder %s34, %s35
      %p47 = scmp.eq.s32.totalorder %s18, 1
      %p48 = por %p46, %p47
      %p50 = scmp.ne.s32.totalorder %s35, %s49
      %p51 = scmp.eq.s32.totalorder %s18, 0
      %p52 = por %p50, %p51
      %s54 = sadd.s32 %s53, 1
      %p57 = scmp.eq.s32.totalorder %s12, 1
      %p58 = scmp.ne.s32.totalorder %s53, %s55
      %p59 = scmp.eq.s32.totalorder %s12, 0
      %p60 = por %p58, %p59
      %p61 = scmp.ne.s32.totalorder %s53, %s55
      %p62 = scmp.eq.s32.totalorder %s17, 1
      %p63 = por %p61, %p62
      %p64 = scmp.ne.s32.totalorder %s55, %s56
      %p65 = scmp.eq.s32.totalorder %s17, 0
      %p66 = por %p64, %p65
      %p67 = scmp.ne.s32.totalorder %s55, %s56
      %p68 = scmp.eq.s32.totalorder %s18, 1
      %p69 = por %p67, %p68
      %p71 = scmp.ne.s32.totalorder %s56, %s70
      %p72 = scmp.eq.s32.totalorder %s18, 0
      %p73 = por %p71, %p72
      %s75 = sadd.s32 %s74, 1
      %p78 = scmp.eq.s32.totalorder %s12, 1
      %p79 = scmp.ne.s32.totalorder %s74, %s76
      %p80 = scmp.eq.s32.totalorder %s12, 0
      %p81 = por %p79, %p80
      %p82 = scmp.ne.s32.totalorder %s74, %s76
      %p83 = scmp.eq.s32.totalorder %s17, 1
      %p84 = por %p82, %p83
      %p85 = scmp.ne.s32.totalorder %s76, %s77
      %p86 = scmp.eq.s32.totalorder %s17, 0
      %p87 = por %p85, %p86
      %p88 = scmp.ne.s32.totalorder %s76, %s77
      %p89 = scmp.eq.s32.totalorder %s18, 1
      %p90 = por %p88, %p89
      %p92 = scmp.ne.s32.totalorder %s77, %s91
      %p93 = scmp.eq.s32.totalorder %s18, 0
      %p94 = por %p92, %p93
      %s95 = ssub.s32 %s19, %s31
      %p96 = scmp.eq.s32.totalorder %s95, 0
      %s98 = sadd.s32 %s97, 1
      %s99 = scalar_select %p96, %s97, %s98
      %p102 = pneg %p96
      %p103 = scmp.eq.s32.totalorder %s12, 1
      %p104 = por %p102, %p103
      %p105 = scmp.ne.s32.totalorder %s97, %s100
      %p106 = scmp.eq.s32.totalorder %s12, 0
      %p107 = por %p105, %p106
      %p108 = scmp.ne.s32.totalorder %s97, %s100
      %p109 = scmp.eq.s32.totalorder %s17, 1
      %p110 = por %p108, %p109
      %p111 = scmp.ne.s32.totalorder %s100, %s101
      %p112 = scmp.eq.s32.totalorder %s17, 0
      %p113 = por %p111, %p112
      %p114 = scmp.ne.s32.totalorder %s100, %s101
      %p115 = scmp.eq.s32.totalorder %s18, 1
      %p116 = por %p114, %p115
      %p118 = scmp.ne.s32.totalorder %s101, %s117
      %p119 = scmp.eq.s32.totalorder %s18, 0
      %p120 = por %p118, %p119
      %p121 = scmp.le.s32.totalorder 1, %s12
      %p122 = scmp.lt.s32.totalorder %s12, 3
      %p123 = pnand %p121, %p122
      %p124 = pneg %p123
      // Predicated region
      $region9: #{tpu_custom_call.1} parent=5 // pred_check
        _
      $region10: #{tpu_custom_call.1} parent=5 // pred_check_branch
        %126 = sbr.rel (%p123) target = $region12
      $region11: #{tpu_custom_call.1} parent=5 // pred_region
        %s127 = ssub.s32 %s12, 1
        // Predicated region
        $region13: #{tpu_custom_call.1} parent=11 // pred_check
          %p128 = pneg %p45
        $region14: #{tpu_custom_call.1} parent=11 // pred_check_branch
          %130 = sbr.rel (%p128) target = $region16
        $region15: #{tpu_custom_call.1} parent=11 // pred_region
          %s132 = ssub.s32 256, 256
          %133 = vsyncadd [#allocation4], %s132
          %s134 = sshll.u32 [#allocation3], 4
          %s135 = int_to_ptr.vmem [resolvable:$true] %s134
          %140 = dma.hbm_to_vmem [thread:$0]  %s0, 256, %s135, [#allocation4], 128, 128, 8
        $region16: #{tpu_custom_call.1} parent=11 // pred_fallthru
          _
        // Predicated region
        $region17: #{tpu_custom_call.1} parent=11 // pred_check
          %p141 = pneg %p66
        $region18: #{tpu_custom_call.1} parent=11 // pred_check_branch
          %143 = sbr.rel (%p141) target = $region20
        $region19: #{tpu_custom_call.1} parent=11 // pred_region
          %s145 = ssub.s32 256, 256
          %146 = vsyncadd [#allocation7], %s145
          %s147 = sshll.u32 [#allocation6], 4
          %s148 = int_to_ptr.vmem [resolvable:$true] %s147
          %153 = dma.hbm_to_vmem [thread:$0]  %s1, 256, %s148, [#allocation7], 128, 128, 8
        $region20: #{tpu_custom_call.1} parent=11 // pred_fallthru
          _
        // Predicated region
        $region21: #{tpu_custom_call.1} parent=11 // pred_check
          %p154 = pneg %p87
        $region22: #{tpu_custom_call.1} parent=11 // pred_check_branch
          %156 = sbr.rel (%p154) target = $region24
        $region23: #{tpu_custom_call.1} parent=11 // pred_region
          %s158 = ssub.s32 16, 16
          %159 = vsyncadd [#allocation7], %s158
          %s161 = sshll.u32 [#allocation8], 4
          %s162 = int_to_ptr.vmem [resolvable:$true] %s161
          %164 = dma.hbm_to_vmem [thread:$0]  %s2, 16, %s162, [#allocation7]
        $region24: #{tpu_custom_call.1} parent=11 // pred_fallthru
          _
      $region12: #{tpu_custom_call.1} parent=5 // pred_fallthru
        _
      %p165 = scmp.lt.s32.totalorder %s12, 2
      // Predicated region
      $region25: #{tpu_custom_call.1} parent=5 // pred_check
        %p166 = pneg %p165
      $region26: #{tpu_custom_call.1} parent=5 // pred_check_branch
        %168 = sbr.rel (%p166) target = $region28
      $region27: #{tpu_custom_call.1} parent=5 // pred_region
        _
      $region28: #{tpu_custom_call.1} parent=5 // pred_fallthru
        _
      %p169 = scmp.le.s32.totalorder 1, %s12
      %p170 = scmp.lt.s32.totalorder %s12, 3
      %p171 = pnand %p169, %p170
      %p172 = pneg %p171
      // Predicated region
      $region29: #{tpu_custom_call.1} parent=5 // pred_check
        _
      $region30: #{tpu_custom_call.1} parent=5 // pred_check_branch
        %174 = sbr.rel (%p171) target = $region32
      $region31: #{tpu_custom_call.1} parent=5 // pred_region
        %s175 = ssub.s32 %s12, 1
        // Predicated region
        $region33: #{tpu_custom_call.1} parent=31 // pred_check
          %p176 = pneg %p45
        $region34: #{tpu_custom_call.1} parent=31 // pred_check_branch
          %178 = sbr.rel (%p176) target = $region36
        $region35: #{tpu_custom_call.1} parent=31 // pred_region
          %179 = dma.done [#allocation4], 256
        $region36: #{tpu_custom_call.1} parent=31 // pred_fallthru
          _
        // Predicated region
        $region37: #{tpu_custom_call.1} parent=31 // pred_check
          %p180 = pneg %p66
        $region38: #{tpu_custom_call.1} parent=31 // pred_check_branch
          %182 = sbr.rel (%p180) target = $region40
        $region39: #{tpu_custom_call.1} parent=31 // pred_region
          %183 = dma.done [#allocation7], 256
        $region40: #{tpu_custom_call.1} parent=31 // pred_fallthru
          _
        // Predicated region
        $region41: #{tpu_custom_call.1} parent=31 // pred_check
          %p184 = pneg %p87
        $region42: #{tpu_custom_call.1} parent=31 // pred_check_branch
          %186 = sbr.rel (%p184) target = $region44
        $region43: #{tpu_custom_call.1} parent=31 // pred_region
          %187 = dma.done [#allocation7], 16
        $region44: #{tpu_custom_call.1} parent=31 // pred_fallthru
          _
        %p188 = pneg %p45
        %p189 = pneg %p42
        %p190 = pneg %p66
        %p191 = pneg %p63
        %p192 = pneg %p87
        %p193 = pneg %p84
        %p194 = pneg %p113
        %p195 = pneg %p110
        %v196 = vlaneseq
        %v197 = vand.u32 %v196, 127
        %p198 = scmp.eq.s32.totalorder %s22, 0
        // Predicated region
        $region45: #{tpu_custom_call.1} parent=31 // pred_check
          %p199 = pneg %p198
        $region46: #{tpu_custom_call.1} parent=31 // pred_check_branch
          %201 = sbr.rel (%p199) target = $region48
        $region47: #{tpu_custom_call.1} parent=31 // pred_region
          %202 = vst [vmem:[#allocation9] sm:$0x1] 0.0
          %vm203 = vcmask 122880
          %204 = vst.msk [vmem:[#allocation2] sm:$0x1] %vm203, 0.0
          %v205 = vld [vmem:[#allocation3] sm:$0xff]
          %v206 = vld [vmem:[#allocation3 + $0x8] sm:$0xff]
          %v207 = vmul.f32 %v205, %v205
          %v208 = vmul.f32 %v206, %v206
          %209 = vmatprep.subr.mxu0 0.0
          %210 = vmatpush1.xpose.msra.mxu0 %v207
          %211 = vmatprep.subr.mxu0 0.0
          %212 = vmatpush1.xpose.msra.mxu0 %v208
          %213 = vmatprep.subr.mxu0 0.0
          %214 = vmatpush1.xpose.msra.mxu0 0.0
          %215 = vmatprep.subr.mxu0 0.0
          %216 = vmatpush1.xpose.msra.mxu0 0.0
          %217 = vmatprep.subr.mxu0 0.0
          %218 = vmatpush1.xpose.msra.mxu0 0.0
          %219 = vmatprep.subr.mxu0 0.0
          %220 = vmatpush1.xpose.msra.mxu0 0.0
          %221 = vmatprep.subr.mxu0 0.0
          %222 = vmatpush1.xpose.msra.mxu0 0.0
          %223 = vmatprep.subr.mxu0 0.0
          %224 = vmatpush1.xpose.msra.mxu0 0.0
          %225 = vmatprep.subr.mxu0 0.0
          %226 = vmatpush1.xpose.msra.mxu0 0.0
          %227 = vmatprep.subr.mxu0 0.0
          %228 = vmatpush1.xpose.msra.mxu0 0.0
          %229 = vmatprep.subr.mxu0 0.0
          %230 = vmatpush1.xpose.msra.mxu0 0.0
          %231 = vmatprep.subr.mxu0 0.0
          %232 = vmatpush1.xpose.msra.mxu0 0.0
          %233 = vmatprep.subr.mxu0 0.0
          %234 = vmatpush1.xpose.msra.mxu0 0.0
          %235 = vmatprep.subr.mxu0 0.0
          %236 = vmatpush1.xpose.msra.mxu0 0.0
          %237 = vmatprep.subr.mxu0 0.0
          %238 = vmatpush1.xpose.msra.mxu0 0.0
          %239 = vmatprep.subr.mxu0 0.0
          %240 = vmatpush1.xpose.msra.mxu0 0.0
          %241 = vmatprep.subr.mxu0 0.0
          %242 = vmatpush1.xpose.msra.mxu0 0.0
          %243 = vmatprep.subr.mxu0 0.0
          %244 = vmatpush1.xpose.msra.mxu0 0.0
          %245 = vmatprep.subr.mxu0 0.0
          %246 = vmatpush1.xpose.msra.mxu0 0.0
          %247 = vmatprep.subr.mxu0 0.0
          %248 = vmatpush1.xpose.msra.mxu0 0.0
          %249 = vmatprep.subr.mxu0 0.0
          %250 = vmatpush1.xpose.msra.mxu0 0.0
          %251 = vmatprep.subr.mxu0 0.0
          %252 = vmatpush1.xpose.msra.mxu0 0.0
          %253 = vmatprep.subr.mxu0 0.0
          %254 = vmatpush1.xpose.msra.mxu0 0.0
          %255 = vmatprep.subr.mxu0 0.0
          %256 = vmatpush1.xpose.msra.mxu0 0.0
          %257 = vmatprep.subr.mxu0 0.0
          %258 = vmatpush1.xpose.msra.mxu0 0.0
          %259 = vmatprep.subr.mxu0 0.0
          %260 = vmatpush1.xpose.msra.mxu0 0.0
          %261 = vmatprep.subr.mxu0 0.0
          %262 = vmatpush1.xpose.msra.mxu0 0.0
          %263 = vmatprep.subr.mxu0 0.0
          %264 = vmatpush1.xpose.msra.mxu0 0.0
          %265 = vmatprep.subr.mxu0 0.0
          %266 = vmatpush1.xpose.msra.mxu0 0.0
          %267 = vmatprep.subr.mxu0 0.0
          %268 = vmatpush1.xpose.msra.mxu0 0.0
          %269 = vmatprep.subr.mxu0 0.0
          %270 = vmatpush1.xpose.msra.mxu0 0.0
          %271 = vmatprep.subr.mxu0 0.0
          %272 = vmatpush1.xpose.msra.mxu0 0.0
          %273 = vmatprep.mubr.f32.mxu0 0.0
          %274 = vmatmul.mubr.f32.gmra.mrb[0].mxu0 1.0
          %v275 = vpop.f32.mrb[0].mxu0
          %v276 = vadd.f32 0.0, %v275
          %v277 = vpop.f32.mrb[0].mxu0
          %278 = vdwg.mxu0
          %v279 = vld [vmem:[#allocation2] sm:$0x1]
          %v280 = vadd.f32 %v279, %v276
          %281 = vst.msk [vmem:[#allocation2] sm:$0x1] %vm203, %v280
        $region48: #{tpu_custom_call.1} parent=31 // pred_fallthru
          _
        %s282 = smul.u32 %s21, 2
        %s283 = sadd.s32 %s282, %s22
        %s284 = smul.u32 %s283, 8
        %s285 = scalar_lea.vmem [#allocation3], %s284
        %v286 = vld [vmem:[%s285] sm:$0xff]
        %v287 = vld [vmem:[#allocation3] sm:$0xff]
        %v288 = vld [vmem:[#allocation3 + $0x8] sm:$0xff]
        %289 = vmatprep.subr.mxu0 0.0
        %290 = vmatpush1.xpose.msra.mxu0 %v287
        %291 = vmatprep.subr.mxu0 0.0
        %292 = vmatpush1.xpose.msra.mxu0 %v288
        %293 = vmatprep.subr.mxu0 0.0
        %294 = vmatpush1.xpose.msra.mxu0 0.0
        %295 = vmatprep.subr.mxu0 0.0
        %296 = vmatpush1.xpose.msra.mxu0 0.0
        %297 = vmatprep.subr.mxu0 0.0
        %298 = vmatpush1.xpose.msra.mxu0 0.0
        %299 = vmatprep.subr.mxu0 0.0
        %300 = vmatpush1.xpose.msra.mxu0 0.0
        %301 = vmatprep.subr.mxu0 0.0
        %302 = vmatpush1.xpose.msra.mxu0 0.0
        %303 = vmatprep.subr.mxu0 0.0
        %304 = vmatpush1.xpose.msra.mxu0 0.0
        %305 = vmatprep.subr.mxu0 0.0
        %306 = vmatpush1.xpose.msra.mxu0 0.0
        %307 = vmatprep.subr.mxu0 0.0
        %308 = vmatpush1.xpose.msra.mxu0 0.0
        %309 = vmatprep.subr.mxu0 0.0
        %310 = vmatpush1.xpose.msra.mxu0 0.0
        %311 = vmatprep.subr.mxu0 0.0
        %312 = vmatpush1.xpose.msra.mxu0 0.0
        %313 = vmatprep.subr.mxu0 0.0
        %314 = vmatpush1.xpose.msra.mxu0 0.0
        %315 = vmatprep.subr.mxu0 0.0
        %316 = vmatpush1.xpose.msra.mxu0 0.0
        %317 = vmatprep.subr.mxu0 0.0
        %318 = vmatpush1.xpose.msra.mxu0 0.0
        %319 = vmatprep.subr.mxu0 0.0
        %320 = vmatpush1.xpose.msra.mxu0 0.0
        %321 = vmatprep.subr.mxu0 0.0
        %322 = vmatpush1.xpose.msra.mxu0 0.0
        %323 = vmatprep.subr.mxu0 0.0
        %324 = vmatpush1.xpose.msra.mxu0 0.0
        %325 = vmatprep.subr.mxu0 0.0
        %326 = vmatpush1.xpose.msra.mxu0 0.0
        %327 = vmatprep.subr.mxu0 0.0
        %328 = vmatpush1.xpose.msra.mxu0 0.0
        %329 = vmatprep.subr.mxu0 0.0
        %330 = vmatpush1.xpose.msra.mxu0 0.0
        %331 = vmatprep.subr.mxu0 0.0
        %332 = vmatpush1.xpose.msra.mxu0 0.0
        %333 = vmatprep.subr.mxu0 0.0
        %334 = vmatpush1.xpose.msra.mxu0 0.0
        %335 = vmatprep.subr.mxu0 0.0
        %336 = vmatpush1.xpose.msra.mxu0 0.0
        %337 = vmatprep.subr.mxu0 0.0
        %338 = vmatpush1.xpose.msra.mxu0 0.0
        %339 = vmatprep.subr.mxu0 0.0
        %340 = vmatpush1.xpose.msra.mxu0 0.0
        %341 = vmatprep.subr.mxu0 0.0
        %342 = vmatpush1.xpose.msra.mxu0 0.0
        %343 = vmatprep.subr.mxu0 0.0
        %344 = vmatpush1.xpose.msra.mxu0 0.0
        %345 = vmatprep.subr.mxu0 0.0
        %346 = vmatpush1.xpose.msra.mxu0 0.0
        %347 = vmatprep.subr.mxu0 0.0
        %348 = vmatpush1.xpose.msra.mxu0 0.0
        %349 = vmatprep.subr.mxu0 0.0
        %350 = vmatpush1.xpose.msra.mxu0 0.0
        %351 = vmatprep.subr.mxu0 0.0
        %352 = vmatpush1.xpose.msra.mxu0 0.0
        %353 = vmatprep.mubr.f32.mxu0 0.0
        %354 = vmatmul.mubr.f32.gmra.mrb[0].mxu0 %v286
        %v355 = vpop.f32.mrb[0].mxu0
        %v356 = vadd.f32 0.0, %v355
        %v357 = vpop.f32.mrb[0].mxu0
        %358 = vdwg.mxu0
        %v359 = vmul.f32 %v286, %v286
        %360 = vadd.xlane.f32.xlu0 %v359
        %v361 = vpop.xlane.xlu0 %360
        %v362 = vld [vmem:[#allocation2] sm:$0x1]
        %v364 = vlaneseq
        %v365 = vshrl.u32 %v364, 7
        %v366 = vsub.s32 0, %v365
        %v367 = vrot.slane %v362, %v366
        %v369 = vadd.f32 %v361, %v367
        %v370 = vmul.f32 %v356, 2.0
        %v371 = vsub.f32 %v369, %v370
        %v372 = vmax.f32 %v371, 1e-12
        %s373 = scalar_lea.vmem [#allocation6], %s284
        %v374 = vld [vmem:[%s373] sm:$0xff]
        %v375 = vld [vmem:[#allocation8] sm:$0x1]
        %376 = vset.pattern.permute.xlu0 0
        %377 = vperm.xlu0 %376, %v374
        %v378 = vpop.permute.xlu0 %377
        %v379 = vlaneseq
        %v380 = vshrl.u32 %v379, 7
        %v381 = vsub.s32 0, %v380
        %v382 = vrot.slane %v375, %v381
        %vm383 = vcmp.eq.s32.totalorder %v378, %v382
        %v384 = vrsqrt.pop %v372
        %v385 = vmul.f32 %v372, %v384
        %vm386 = vcmp.eq.f32.partialorder %v372, inf
        %v387 = vsel %vm386, %v372, %v385
        %vm388 = vcmp.eq.f32.partialorder %v372, 0.0
        %v389 = vand.u32 %v372, 2147483648
        %v390 = vsel %vm388, %v389, %v387
        %v391 = vsel %vm383, %v390, -1e+30
        %vm392 = vcmask 130048
        %v393 = vsel %vm392, %v391, -inf
        %394 = vmax.xlane.f32.xlu0 %v393
        %v395 = vpop.xlane.xlu0 %394
        %v396 = vsub.f32 %v391, %v395
        %v397 = vmul.f32 %v396, 1.442695
        %v398 = vpow.pop %v397
        %v399 = vmul.f32 %v390, %v398
        %v400 = vsel %vm392, %v399, 0.0
        %401 = vadd.xlane.f32.xlu0 %v400
        %v402 = vpop.xlane.xlu0 %401
        %v403 = vsel %vm392, %v398, 0.0
        %404 = vadd.xlane.f32.xlu0 %v403
        %v405 = vpop.xlane.xlu0 %404
        %v406 = vrcp.pop %v405
        %v407 = vmul.f32 %v402, %v406
        %v408 = vsub.f32 0.0, %v390
        %v409 = vsel %vm383, -1e+30, %v408
        %v410 = vsel %vm392, %v409, -inf
        %411 = vmax.xlane.f32.xlu0 %v410
        %v412 = vpop.xlane.xlu0 %411
        %v413 = vsub.f32 %v409, %v412
        %v414 = vmul.f32 %v413, 1.442695
        %v415 = vpow.pop %v414
        %v416 = vmul.f32 %v390, %v415
        %v417 = vsel %vm392, %v416, 0.0
        %418 = vadd.xlane.f32.xlu0 %v417
        %v419 = vpop.xlane.xlu0 %418
        %v420 = vsel %vm392, %v415, 0.0
        %421 = vadd.xlane.f32.xlu0 %v420
        %v422 = vpop.xlane.xlu0 %421
        %v423 = vrcp.pop %v422
        %v424 = vmul.f32 %v419, %v423
        %v425 = vsub.f32 %v407, %v424
        %v426 = vadd.f32 %v425, 0.0
        %v427 = vmax.f32 %v426, 0.0
        %vm428 = vcmask 7168
        %v429 = vsel %vm428, %v427, 0.0
        %430 = vadd.xlane.f32.xlu0 %v429
        %v431 = vpop.xlane.xlu0 %430
        %v432 = vrot.slane %v431, 4
        %v433 = vadd.f32 %v431, %v432
        %v434 = vrot.slane %v433, 2
        %v435 = vadd.f32 %v433, %v434
        %v436 = vrot.slane %v435, 1
        %v437 = vadd.f32 %v435, %v436
        %s438 = vtos %v437
        %vm439 = vcmp.gt.f32.partialorder %v424, %v407
        %v440 = vsel %vm439, 1, 0
        %v441 = vcvt.s32.f32 %v440
        %v442 = vsel %vm428, %v441, 0.0
        %443 = vadd.xlane.f32.xlu0 %v442
        %v444 = vpop.xlane.xlu0 %443
        %v445 = vrot.slane %v444, 4
        %v446 = vadd.f32 %v444, %v445
        %v447 = vrot.slane %v446, 2
        %v448 = vadd.f32 %v446, %v447
        %v449 = vrot.slane %v448, 1
        %v450 = vadd.f32 %v448, %v449
        %s451 = vtos %v450
        %vm452 = vcmp.gt.f32.partialorder %v427, 0.001
        %v453 = vsel %vm452, 1, 0
        %v454 = vcvt.s32.f32 %v453
        %v455 = vsel %vm428, %v454, 0.0
        %456 = vadd.xlane.f32.xlu0 %v455
        %v457 = vpop.xlane.xlu0 %456
        %v458 = vrot.slane %v457, 4
        %v459 = vadd.f32 %v457, %v458
        %v460 = vrot.slane %v459, 2
        %v461 = vadd.f32 %v459, %v460
        %v462 = vrot.slane %v461, 1
        %v463 = vadd.f32 %v461, %v462
        %s464 = vtos %v463
        %v465 = vsel %vm428, %v424, 0.0
        %466 = vadd.xlane.f32.xlu0 %v465
        %v467 = vpop.xlane.xlu0 %466
        %v468 = vrot.slane %v467, 4
        %v469 = vadd.f32 %v467, %v468
        %v470 = vrot.slane %v469, 2
        %v471 = vadd.f32 %v469, %v470
        %v472 = vrot.slane %v471, 1
        %v473 = vadd.f32 %v471, %v472
        %s474 = vtos %v473
        %v475 = vsel %vm428, %v407, 0.0
        %476 = vadd.xlane.f32.xlu0 %v475
        %v477 = vpop.xlane.xlu0 %476
        %v478 = vrot.slane %v477, 4
        %v479 = vadd.f32 %v477, %v478
        %v480 = vrot.slane %v479, 2
        %v481 = vadd.f32 %v479, %v480
        %v482 = vrot.slane %v481, 1
        %v483 = vadd.f32 %v481, %v482
        %s484 = vtos %v483
        %vm485 = vcmp.eq.s32.totalorder %v197, 0
        %v486 = vstv %s438
        %v487 = vsel %vm485, %v486, 0.0
        %vm488 = vcmp.eq.s32.totalorder %v197, 1
        %v489 = vstv %s451
        %v490 = vsel %vm488, %v489, %v487
        %vm491 = vcmp.eq.s32.totalorder %v197, 2
        %v492 = vstv %s464
        %v493 = vsel %vm491, %v492, %v490
        %vm494 = vcmp.eq.s32.totalorder %v197, 3
        %v495 = vstv %s474
        %v496 = vsel %vm494, %v495, %v493
        %vm497 = vcmp.eq.s32.totalorder %v197, 4
        %v498 = vstv %s484
        %v499 = vsel %vm497, %v498, %v496
        %v500 = vld [vmem:[#allocation9] sm:$0x1]
        %v501 = vadd.f32 %v500, %v499
        %502 = vst [vmem:[#allocation9] sm:$0x1] %v501
        %p503 = scmp.eq.s32.totalorder %s22, 1
        // Predicated region
        $region49: #{tpu_custom_call.1} parent=31 // pred_check
          %p504 = pneg %p503
        $region50: #{tpu_custom_call.1} parent=31 // pred_check_branch
          %506 = sbr.rel (%p504) target = $region52
        $region51: #{tpu_custom_call.1} parent=31 // pred_region
          %v507 = vsel %vm491, 1.0, 0.0625
          %v508 = vsel %vm488, 6.25, %v507
          %v509 = vld [vmem:[#allocation9] sm:$0x1]
          %v510 = vmul.f32 %v509, %v508
          %511 = vst [vmem:[#allocation9] sm:$0x1] %v510
        $region52: #{tpu_custom_call.1} parent=31 // pred_fallthru
          _
        // Predicated region
        $region53: #{tpu_custom_call.1} parent=31 // pred_check
          %p512 = pneg %p110
        $region54: #{tpu_custom_call.1} parent=31 // pred_check_branch
          %514 = sbr.rel (%p512) target = $region56
        $region55: #{tpu_custom_call.1} parent=31 // pred_region
          %s516 = ssub.s32 16, 16
          %517 = vsyncadd [#allocation5], %s516
          %s518 = smul.addr %s21, 16
          %s519 = scalar_lea.hbm %s3, %s518
          %s521 = sshll.u32 [#allocation9], 4
          %s522 = int_to_ptr.vmem [resolvable:$true] %s521
          %524 = dma.vmem_to_hbm [thread:$0]  %s522, 16, %s519, [#allocation5]
        $region56: #{tpu_custom_call.1} parent=31 // pred_fallthru
          _
        // Predicated region
        $region57: #{tpu_custom_call.1} parent=31 // pred_check
          %p525 = pneg %p110
        $region58: #{tpu_custom_call.1} parent=31 // pred_check_branch
          %527 = sbr.rel (%p525) target = $region60
        $region59: #{tpu_custom_call.1} parent=31 // pred_region
          %528 = dma.done [#allocation5], 16
        $region60: #{tpu_custom_call.1} parent=31 // pred_fallthru
          _
      $region32: #{tpu_custom_call.1} parent=5 // pred_fallthru
        _
      %p529 = scmp.le.s32.totalorder 2, %s12
      // Predicated region
      $region61: #{tpu_custom_call.1} parent=5 // pred_check
        %p530 = pneg %p529
      $region62: #{tpu_custom_call.1} parent=5 // pred_check_branch
        %532 = sbr.rel (%p530) target = $region64
      $region63: #{tpu_custom_call.1} parent=5 // pred_region
        %s533 = ssub.s32 %s12, 2
      $region64: #{tpu_custom_call.1} parent=5 // pred_fallthru
        _
    $region6: #{tpu_custom_call.1} parent=1 // loop_footer
      %s16 = sadd.s32 1, %s12
    $region7: #{tpu_custom_call.1} parent=1 // loop_footer_branch
      %11 = sbr.rel target = $region3
    $region8: #{tpu_custom_call.1} parent=1 // loop_exit
      _
    %534 = vsyncpa [#allocation4], 1
    %s535 = scalar_lea.sflag [#allocation4], 1
    %536 = vsyncpa %s535, 1
    %537 = vsyncpa [#allocation7], 1
    %538 = vsyncpa [#allocation5], 1
    %s539 = scalar_lea.sflag [#allocation5], 1
    %540 = vsyncpa %s539, 1

// kernel: tpu_custom_call.1
$region0: #{tpu_custom_call.1}
  #allocation0 [shape = 'u32[]', space=smem, size = 0x4, offset = 0x4, fixed_abs, tag = 'smem constant byte address 0x4 - core index']
  #allocation1 [shape = 'u32[144,128]{1,0:T(1,128)}', space=vmem, size = 0x12000, scoped, tag = 'internal scratch']
  #allocation2 [shape = 'f32[1,16]{1,0:T(1,128)}', space=vmem, size = 0x200, scoped, tag = 'scratch operand']
  %s0 = inlined_call_operand.hbm [shape: f32[16,128], index: 0, kind: input, shape index: {}]
  %s1 = inlined_call_operand.hbm [shape: s32[16,1], index: 1, kind: input, shape index: {}]
  %s2 = inlined_call_operand.hbm [shape: s32[1,16], index: 2, kind: input, shape index: {}]
  %s3 = inlined_call_operand.hbm [shape: f32[1,1,128], index: 3, kind: output, shape index: {}]
  %s4 = sld [smem:[#allocation0]]
  $region65: #{tpu_custom_call.1} parent=0
    _
  %s6 = ssub.s32 1, %s4
  %s7 = scalar_select 0, %s6, %s4
  $region1: #{tpu_custom_call.1} parent=0
    #allocation3 [shape = 'u8[8192]{0}', space=vmem, size = 0x2000, scoped, tag = 'input window, operand 0, single buffered']
    #allocation4 [shape = 's32[2]{0}', space=sflag, size = 0x8, scoped, tag = 'scoped memory for tpu_custom_call.1']
    #allocation5 [shape = 's32[2]{0}', space=sflag, size = 0x8, scoped, tag = 'scoped memory for tpu_custom_call.1']
    #allocation6 [shape = 'u8[8192]{0}', space=vmem, size = 0x2000, scoped, tag = 'input window, operand 1, single buffered']
    #allocation7 [shape = 's32[1]{0}', space=sflag, size = 0x4, scoped, tag = 'scoped memory for tpu_custom_call.1']
    #allocation8 [shape = 'u8[512]{0}', space=vmem, size = 0x400, scoped, tag = 'input window, operand 2, single buffered']
    #allocation9 [shape = 'u8[512]{0}', space=vmem, size = 0x400, scoped, tag = 'output window, operand 0, single buffered']
    %8 = vsyncpa [#allocation4], 0
    %9 = vsyncpa [#allocation7], 0
    %10 = vsyncpa [#allocation5], 0
    loop: start=0, step=1, limit=4
    $region2: #{tpu_custom_call.1} parent=1 // loop_pre_header
      _
    $region3: #{tpu_custom_call.1} parent=1 // loop_header
      %s12 = sphi 0, %s16
      %p13 = scmp.ge.s32.totalorder %s12, 4
      %s19 = sphi 0, %s31
      %s20 = sphi 0, %s27
      %s21 = sphi 0, %s19
      %s22 = sphi 0, %s20
      %s23 = sphi 0, %s21
      %s24 = sphi 0, %s22
      %s32 = sphi 0, %s32
      %s34 = sphi 0, %s32
      %s35 = sphi 0, %s34
      %s49 = sphi 0, %s35
      %s53 = sphi 0, %s53
      %s55 = sphi 0, %s53
      %s56 = sphi 0, %s55
      %s70 = sphi 0, %s56
      %s74 = sphi 0, %s74
      %s76 = sphi 0, %s74
      %s77 = sphi 0, %s76
      %s91 = sphi 0, %s77
      %s97 = sphi 0, %s99
      %s100 = sphi 0, %s97
      %s101 = sphi 0, %s100
      %s117 = sphi 0, %s101
    $region4: #{tpu_custom_call.1} parent=1 // loop_header_branch
      %15 = sbr.rel (%p13) target = $region8
    $region5: #{tpu_custom_call.1} parent=1 // loop_body
      %s17 = ssub.s32 %s12, 1
      %s18 = ssub.s32 %s12, 2
      %s25 = sadd.s32 1, %s20
      %p26 = scmp.ge.s32.totalorder %s25, 2
      %s27 = scalar_select %p26, 0, %s25
      %s28 = sadd.s32 1, %s19
      %s29 = scalar_select %p26, %s28, %s19
      %p30 = scmp.ge.s32.totalorder %s29, 1
      %s31 = scalar_select %p30, 0, %s29
      %s33 = sadd.s32 %s32, 1
      %p36 = scmp.eq.s32.totalorder %s12, 1
      %p37 = scmp.ne.s32.totalorder %s32, %s34
      %p38 = scmp.eq.s32.totalorder %s12, 0
      %p39 = por %p37, %p38
      %p40 = scmp.ne.s32.totalorder %s32, %s34
      %p41 = scmp.eq.s32.totalorder %s17, 1
      %p42 = por %p40, %p41
      %p43 = scmp.ne.s32.totalorder %s34, %s35
      %p44 = scmp.eq.s32.totalorder %s17, 0
      %p45 = por %p43, %p44
      %p46 = scmp.ne.s32.totalorder %s34, %s35
      %p47 = scmp.eq.s32.totalorder %s18, 1
      %p48 = por %p46, %p47
      %p50 = scmp.ne.s32.totalorder %s35, %s49
      %p51 = scmp.eq.s32.totalorder %s18, 0
      %p52 = por %p50, %p51
      %s54 = sadd.s32 %s53, 1
      %p57 = scmp.eq.s32.totalorder %s12, 1
      %p58 = scmp.ne.s32.totalorder %s53, %s55
      %p59 = scmp.eq.s32.totalorder %s12, 0
      %p60 = por %p58, %p59
      %p61 = scmp.ne.s32.totalorder %s53, %s55
      %p62 = scmp.eq.s32.totalorder %s17, 1
      %p63 = por %p61, %p62
      %p64 = scmp.ne.s32.totalorder %s55, %s56
      %p65 = scmp.eq.s32.totalorder %s17, 0
      %p66 = por %p64, %p65
      %p67 = scmp.ne.s32.totalorder %s55, %s56
      %p68 = scmp.eq.s32.totalorder %s18, 1
      %p69 = por %p67, %p68
      %p71 = scmp.ne.s32.totalorder %s56, %s70
      %p72 = scmp.eq.s32.totalorder %s18, 0
      %p73 = por %p71, %p72
      %s75 = sadd.s32 %s74, 1
      %p78 = scmp.eq.s32.totalorder %s12, 1
      %p79 = scmp.ne.s32.totalorder %s74, %s76
      %p80 = scmp.eq.s32.totalorder %s12, 0
      %p81 = por %p79, %p80
      %p82 = scmp.ne.s32.totalorder %s74, %s76
      %p83 = scmp.eq.s32.totalorder %s17, 1
      %p84 = por %p82, %p83
      %p85 = scmp.ne.s32.totalorder %s76, %s77
      %p86 = scmp.eq.s32.totalorder %s17, 0
      %p87 = por %p85, %p86
      %p88 = scmp.ne.s32.totalorder %s76, %s77
      %p89 = scmp.eq.s32.totalorder %s18, 1
      %p90 = por %p88, %p89
      %p92 = scmp.ne.s32.totalorder %s77, %s91
      %p93 = scmp.eq.s32.totalorder %s18, 0
      %p94 = por %p92, %p93
      %s95 = ssub.s32 %s19, %s31
      %p96 = scmp.eq.s32.totalorder %s95, 0
      %s98 = sadd.s32 %s97, 1
      %s99 = scalar_select %p96, %s97, %s98
      %p102 = pneg %p96
      %p103 = scmp.eq.s32.totalorder %s12, 1
      %p104 = por %p102, %p103
      %p105 = scmp.ne.s32.totalorder %s97, %s100
      %p106 = scmp.eq.s32.totalorder %s12, 0
      %p107 = por %p105, %p106
      %p108 = scmp.ne.s32.totalorder %s97, %s100
      %p109 = scmp.eq.s32.totalorder %s17, 1
      %p110 = por %p108, %p109
      %p111 = scmp.ne.s32.totalorder %s100, %s101
      %p112 = scmp.eq.s32.totalorder %s17, 0
      %p113 = por %p111, %p112
      %p114 = scmp.ne.s32.totalorder %s100, %s101
      %p115 = scmp.eq.s32.totalorder %s18, 1
      %p116 = por %p114, %p115
      %p118 = scmp.ne.s32.totalorder %s101, %s117
      %p119 = scmp.eq.s32.totalorder %s18, 0
      %p120 = por %p118, %p119
      %p121 = scmp.le.s32.totalorder 1, %s12
      %p122 = scmp.lt.s32.totalorder %s12, 3
      %p123 = pnand %p121, %p122
      %p124 = pneg %p123
      // Predicated region
      $region9: #{tpu_custom_call.1} parent=5 // pred_check
        _
      $region10: #{tpu_custom_call.1} parent=5 // pred_check_branch
        %126 = sbr.rel (%p123) target = $region12
      $region11: #{tpu_custom_call.1} parent=5 // pred_region
        %s127 = ssub.s32 %s12, 1
        // Predicated region
        $region13: #{tpu_custom_call.1} parent=11 // pred_check
          %p128 = pneg %p45
        $region14: #{tpu_custom_call.1} parent=11 // pred_check_branch
          %130 = sbr.rel (%p128) target = $region16
        $region15: #{tpu_custom_call.1} parent=11 // pred_region
          %s132 = ssub.s32 256, 256
          %133 = vsyncadd [#allocation4], %s132
          %s134 = sshll.u32 [#allocation3], 4
          %s135 = int_to_ptr.vmem [resolvable:$true] %s134
          %140 = dma.hbm_to_vmem [thread:$0]  %s0, 256, %s135, [#allocation4], 128, 128, 8
        $region16: #{tpu_custom_call.1} parent=11 // pred_fallthru
          _
        // Predicated region
        $region17: #{tpu_custom_call.1} parent=11 // pred_check
          %p141 = pneg %p66
        $region18: #{tpu_custom_call.1} parent=11 // pred_check_branch
          %143 = sbr.rel (%p141) target = $region20
        $region19: #{tpu_custom_call.1} parent=11 // pred_region
          %s145 = ssub.s32 256, 256
          %146 = vsyncadd [#allocation7], %s145
          %s147 = sshll.u32 [#allocation6], 4
          %s148 = int_to_ptr.vmem [resolvable:$true] %s147
          %153 = dma.hbm_to_vmem [thread:$0]  %s1, 256, %s148, [#allocation7], 128, 128, 8
        $region20: #{tpu_custom_call.1} parent=11 // pred_fallthru
          _
        // Predicated region
        $region21: #{tpu_custom_call.1} parent=11 // pred_check
          %p154 = pneg %p87
        $region22: #{tpu_custom_call.1} parent=11 // pred_check_branch
          %156 = sbr.rel (%p154) target = $region24
        $region23: #{tpu_custom_call.1} parent=11 // pred_region
          %s158 = ssub.s32 16, 16
          %159 = vsyncadd [#allocation7], %s158
          %s161 = sshll.u32 [#allocation8], 4
          %s162 = int_to_ptr.vmem [resolvable:$true] %s161
          %164 = dma.hbm_to_vmem [thread:$0]  %s2, 16, %s162, [#allocation7]
        $region24: #{tpu_custom_call.1} parent=11 // pred_fallthru
          _
      $region12: #{tpu_custom_call.1} parent=5 // pred_fallthru
        _
      %p165 = scmp.lt.s32.totalorder %s12, 2
      // Predicated region
      $region25: #{tpu_custom_call.1} parent=5 // pred_check
        %p166 = pneg %p165
      $region26: #{tpu_custom_call.1} parent=5 // pred_check_branch
        %168 = sbr.rel (%p166) target = $region28
      $region27: #{tpu_custom_call.1} parent=5 // pred_region
        _
      $region28: #{tpu_custom_call.1} parent=5 // pred_fallthru
        _
      %p169 = scmp.le.s32.totalorder 1, %s12
      %p170 = scmp.lt.s32.totalorder %s12, 3
      %p171 = pnand %p169, %p170
      %p172 = pneg %p171
      // Predicated region
      $region29: #{tpu_custom_call.1} parent=5 // pred_check
        _
      $region30: #{tpu_custom_call.1} parent=5 // pred_check_branch
        %174 = sbr.rel (%p171) target = $region32
      $region31: #{tpu_custom_call.1} parent=5 // pred_region
        %s175 = ssub.s32 %s12, 1
        // Predicated region
        $region33: #{tpu_custom_call.1} parent=31 // pred_check
          %p176 = pneg %p45
        $region34: #{tpu_custom_call.1} parent=31 // pred_check_branch
          %178 = sbr.rel (%p176) target = $region36
        $region35: #{tpu_custom_call.1} parent=31 // pred_region
          %179 = dma.done [#allocation4], 256
        $region36: #{tpu_custom_call.1} parent=31 // pred_fallthru
          _
        // Predicated region
        $region37: #{tpu_custom_call.1} parent=31 // pred_check
          %p180 = pneg %p66
        $region38: #{tpu_custom_call.1} parent=31 // pred_check_branch
          %182 = sbr.rel (%p180) target = $region40
        $region39: #{tpu_custom_call.1} parent=31 // pred_region
          %183 = dma.done [#allocation7], 256
        $region40: #{tpu_custom_call.1} parent=31 // pred_fallthru
          _
        // Predicated region
        $region41: #{tpu_custom_call.1} parent=31 // pred_check
          %p184 = pneg %p87
        $region42: #{tpu_custom_call.1} parent=31 // pred_check_branch
          %186 = sbr.rel (%p184) target = $region44
        $region43: #{tpu_custom_call.1} parent=31 // pred_region
          %187 = dma.done [#allocation7], 16
        $region44: #{tpu_custom_call.1} parent=31 // pred_fallthru
          _
        %p188 = pneg %p45
        %p189 = pneg %p42
        %p190 = pneg %p66
        %p191 = pneg %p63
        %p192 = pneg %p87
        %p193 = pneg %p84
        %p194 = pneg %p113
        %p195 = pneg %p110
        %v196 = vlaneseq
        %v197 = vand.u32 %v196, 127
        %p198 = scmp.eq.s32.totalorder %s22, 0
        // Predicated region
        $region45: #{tpu_custom_call.1} parent=31 // pred_check
          %p199 = pneg %p198
        $region46: #{tpu_custom_call.1} parent=31 // pred_check_branch
          %201 = sbr.rel (%p199) target = $region48
        $region47: #{tpu_custom_call.1} parent=31 // pred_region
          %202 = vst [vmem:[#allocation9] sm:$0x1] 0.0
          %vm203 = vcmask 122880
          %204 = vst.msk [vmem:[#allocation2] sm:$0x1] %vm203, 0.0
          %v205 = vld [vmem:[#allocation3] sm:$0xff]
          %v206 = vld [vmem:[#allocation3 + $0x8] sm:$0xff]
          %v207 = vmul.f32 %v205, %v205
          %v208 = vmul.f32 %v206, %v206
          %209 = vmatprep.subr.mxu0 0.0
          %210 = vmatpush1.xpose.msra.mxu0 %v207
          %211 = vmatprep.subr.mxu0 0.0
          %212 = vmatpush1.xpose.msra.mxu0 %v208
          %213 = vmatprep.subr.mxu0 0.0
          %214 = vmatpush1.xpose.msra.mxu0 0.0
          %215 = vmatprep.subr.mxu0 0.0
          %216 = vmatpush1.xpose.msra.mxu0 0.0
          %217 = vmatprep.subr.mxu0 0.0
          %218 = vmatpush1.xpose.msra.mxu0 0.0
          %219 = vmatprep.subr.mxu0 0.0
          %220 = vmatpush1.xpose.msra.mxu0 0.0
          %221 = vmatprep.subr.mxu0 0.0
          %222 = vmatpush1.xpose.msra.mxu0 0.0
          %223 = vmatprep.subr.mxu0 0.0
          %224 = vmatpush1.xpose.msra.mxu0 0.0
          %225 = vmatprep.subr.mxu0 0.0
          %226 = vmatpush1.xpose.msra.mxu0 0.0
          %227 = vmatprep.subr.mxu0 0.0
          %228 = vmatpush1.xpose.msra.mxu0 0.0
          %229 = vmatprep.subr.mxu0 0.0
          %230 = vmatpush1.xpose.msra.mxu0 0.0
          %231 = vmatprep.subr.mxu0 0.0
          %232 = vmatpush1.xpose.msra.mxu0 0.0
          %233 = vmatprep.subr.mxu0 0.0
          %234 = vmatpush1.xpose.msra.mxu0 0.0
          %235 = vmatprep.subr.mxu0 0.0
          %236 = vmatpush1.xpose.msra.mxu0 0.0
          %237 = vmatprep.subr.mxu0 0.0
          %238 = vmatpush1.xpose.msra.mxu0 0.0
          %239 = vmatprep.subr.mxu0 0.0
          %240 = vmatpush1.xpose.msra.mxu0 0.0
          %241 = vmatprep.subr.mxu0 0.0
          %242 = vmatpush1.xpose.msra.mxu0 0.0
          %243 = vmatprep.subr.mxu0 0.0
          %244 = vmatpush1.xpose.msra.mxu0 0.0
          %245 = vmatprep.subr.mxu0 0.0
          %246 = vmatpush1.xpose.msra.mxu0 0.0
          %247 = vmatprep.subr.mxu0 0.0
          %248 = vmatpush1.xpose.msra.mxu0 0.0
          %249 = vmatprep.subr.mxu0 0.0
          %250 = vmatpush1.xpose.msra.mxu0 0.0
          %251 = vmatprep.subr.mxu0 0.0
          %252 = vmatpush1.xpose.msra.mxu0 0.0
          %253 = vmatprep.subr.mxu0 0.0
          %254 = vmatpush1.xpose.msra.mxu0 0.0
          %255 = vmatprep.subr.mxu0 0.0
          %256 = vmatpush1.xpose.msra.mxu0 0.0
          %257 = vmatprep.subr.mxu0 0.0
          %258 = vmatpush1.xpose.msra.mxu0 0.0
          %259 = vmatprep.subr.mxu0 0.0
          %260 = vmatpush1.xpose.msra.mxu0 0.0
          %261 = vmatprep.subr.mxu0 0.0
          %262 = vmatpush1.xpose.msra.mxu0 0.0
          %263 = vmatprep.subr.mxu0 0.0
          %264 = vmatpush1.xpose.msra.mxu0 0.0
          %265 = vmatprep.subr.mxu0 0.0
          %266 = vmatpush1.xpose.msra.mxu0 0.0
          %267 = vmatprep.subr.mxu0 0.0
          %268 = vmatpush1.xpose.msra.mxu0 0.0
          %269 = vmatprep.subr.mxu0 0.0
          %270 = vmatpush1.xpose.msra.mxu0 0.0
          %271 = vmatprep.subr.mxu0 0.0
          %272 = vmatpush1.xpose.msra.mxu0 0.0
          %273 = vmatprep.mubr.f32.mxu0 0.0
          %274 = vmatmul.mubr.f32.gmra.mrb[0].mxu0 1.0
          %v275 = vpop.f32.mrb[0].mxu0
          %v276 = vadd.f32 0.0, %v275
          %v277 = vpop.f32.mrb[0].mxu0
          %278 = vdwg.mxu0
          %v279 = vld [vmem:[#allocation2] sm:$0x1]
          %v280 = vadd.f32 %v279, %v276
          %281 = vst.msk [vmem:[#allocation2] sm:$0x1] %vm203, %v280
        $region48: #{tpu_custom_call.1} parent=31 // pred_fallthru
          _
        %s282 = smul.u32 %s21, 2
        %s283 = sadd.s32 %s282, %s22
        %s284 = smul.u32 %s283, 8
        %s285 = scalar_lea.vmem [#allocation3], %s284
        %v286 = vld [vmem:[%s285] sm:$0xff]
        %v287 = vld [vmem:[#allocation3] sm:$0xff]
        %v288 = vld [vmem:[#allocation3 + $0x8] sm:$0xff]
        %289 = vmatprep.subr.mxu0 0.0
        %290 = vmatpush1.xpose.msra.mxu0 %v287
        %291 = vmatprep.subr.mxu0 0.0
        %292 = vmatpush1.xpose.msra.mxu0 %v288
        %293 = vmatprep.subr.mxu0 0.0
        %294 = vmatpush1.xpose.msra.mxu0 0.0
        %295 = vmatprep.subr.mxu0 0.0
        %296 = vmatpush1.xpose.msra.mxu0 0.0
        %297 = vmatprep.subr.mxu0 0.0
        %298 = vmatpush1.xpose.msra.mxu0 0.0
        %299 = vmatprep.subr.mxu0 0.0
        %300 = vmatpush1.xpose.msra.mxu0 0.0
        %301 = vmatprep.subr.mxu0 0.0
        %302 = vmatpush1.xpose.msra.mxu0 0.0
        %303 = vmatprep.subr.mxu0 0.0
        %304 = vmatpush1.xpose.msra.mxu0 0.0
        %305 = vmatprep.subr.mxu0 0.0
        %306 = vmatpush1.xpose.msra.mxu0 0.0
        %307 = vmatprep.subr.mxu0 0.0
        %308 = vmatpush1.xpose.msra.mxu0 0.0
        %309 = vmatprep.subr.mxu0 0.0
        %310 = vmatpush1.xpose.msra.mxu0 0.0
        %311 = vmatprep.subr.mxu0 0.0
        %312 = vmatpush1.xpose.msra.mxu0 0.0
        %313 = vmatprep.subr.mxu0 0.0
        %314 = vmatpush1.xpose.msra.mxu0 0.0
        %315 = vmatprep.subr.mxu0 0.0
        %316 = vmatpush1.xpose.msra.mxu0 0.0
        %317 = vmatprep.subr.mxu0 0.0
        %318 = vmatpush1.xpose.msra.mxu0 0.0
        %319 = vmatprep.subr.mxu0 0.0
        %320 = vmatpush1.xpose.msra.mxu0 0.0
        %321 = vmatprep.subr.mxu0 0.0
        %322 = vmatpush1.xpose.msra.mxu0 0.0
        %323 = vmatprep.subr.mxu0 0.0
        %324 = vmatpush1.xpose.msra.mxu0 0.0
        %325 = vmatprep.subr.mxu0 0.0
        %326 = vmatpush1.xpose.msra.mxu0 0.0
        %327 = vmatprep.subr.mxu0 0.0
        %328 = vmatpush1.xpose.msra.mxu0 0.0
        %329 = vmatprep.subr.mxu0 0.0
        %330 = vmatpush1.xpose.msra.mxu0 0.0
        %331 = vmatprep.subr.mxu0 0.0
        %332 = vmatpush1.xpose.msra.mxu0 0.0
        %333 = vmatprep.subr.mxu0 0.0
        %334 = vmatpush1.xpose.msra.mxu0 0.0
        %335 = vmatprep.subr.mxu0 0.0
        %336 = vmatpush1.xpose.msra.mxu0 0.0
        %337 = vmatprep.subr.mxu0 0.0
        %338 = vmatpush1.xpose.msra.mxu0 0.0
        %339 = vmatprep.subr.mxu0 0.0
        %340 = vmatpush1.xpose.msra.mxu0 0.0
        %341 = vmatprep.subr.mxu0 0.0
        %342 = vmatpush1.xpose.msra.mxu0 0.0
        %343 = vmatprep.subr.mxu0 0.0
        %344 = vmatpush1.xpose.msra.mxu0 0.0
        %345 = vmatprep.subr.mxu0 0.0
        %346 = vmatpush1.xpose.msra.mxu0 0.0
        %347 = vmatprep.subr.mxu0 0.0
        %348 = vmatpush1.xpose.msra.mxu0 0.0
        %349 = vmatprep.subr.mxu0 0.0
        %350 = vmatpush1.xpose.msra.mxu0 0.0
        %351 = vmatprep.subr.mxu0 0.0
        %352 = vmatpush1.xpose.msra.mxu0 0.0
        %353 = vmatprep.mubr.f32.mxu0 0.0
        %354 = vmatmul.mubr.f32.gmra.mrb[0].mxu0 %v286
        %v355 = vpop.f32.mrb[0].mxu0
        %v356 = vadd.f32 0.0, %v355
        %v357 = vpop.f32.mrb[0].mxu0
        %358 = vdwg.mxu0
        %v359 = vmul.f32 %v286, %v286
        %360 = vadd.xlane.f32.xlu0 %v359
        %v361 = vpop.xlane.xlu0 %360
        %v362 = vld [vmem:[#allocation2] sm:$0x1]
        %v364 = vlaneseq
        %v365 = vshrl.u32 %v364, 7
        %v366 = vsub.s32 0, %v365
        %v367 = vrot.slane %v362, %v366
        %v369 = vadd.f32 %v361, %v367
        %v370 = vmul.f32 %v356, 2.0
        %v371 = vsub.f32 %v369, %v370
        %v372 = vmax.f32 %v371, 1e-12
        %s373 = scalar_lea.vmem [#allocation6], %s284
        %v374 = vld [vmem:[%s373] sm:$0xff]
        %v375 = vld [vmem:[#allocation8] sm:$0x1]
        %376 = vset.pattern.permute.xlu0 0
        %377 = vperm.xlu0 %376, %v374
        %v378 = vpop.permute.xlu0 %377
        %v379 = vlaneseq
        %v380 = vshrl.u32 %v379, 7
        %v381 = vsub.s32 0, %v380
        %v382 = vrot.slane %v375, %v381
        %vm383 = vcmp.eq.s32.totalorder %v378, %v382
        %v384 = vrsqrt.pop %v372
        %v385 = vmul.f32 %v372, %v384
        %vm386 = vcmp.eq.f32.partialorder %v372, inf
        %v387 = vsel %vm386, %v372, %v385
        %vm388 = vcmp.eq.f32.partialorder %v372, 0.0
        %v389 = vand.u32 %v372, 2147483648
        %v390 = vsel %vm388, %v389, %v387
        %v391 = vsel %vm383, %v390, -1e+30
        %vm392 = vcmask 130048
        %v393 = vsel %vm392, %v391, -inf
        %394 = vmax.xlane.f32.xlu0 %v393
        %v395 = vpop.xlane.xlu0 %394
        %v396 = vsub.f32 %v391, %v395
        %v397 = vmul.f32 %v396, 1.442695
        %v398 = vpow.pop %v397
        %v399 = vmul.f32 %v390, %v398
        %v400 = vsel %vm392, %v399, 0.0
        %401 = vadd.xlane.f32.xlu0 %v400
        %v402 = vpop.xlane.xlu0 %401
        %v403 = vsel %vm392, %v398, 0.0
        %404 = vadd.xlane.f32.xlu0 %v403
        %v405 = vpop.xlane.xlu0 %404
        %v406 = vrcp.pop %v405
        %v407 = vmul.f32 %v402, %v406
        %v408 = vsub.f32 0.0, %v390
        %v409 = vsel %vm383, -1e+30, %v408
        %v410 = vsel %vm392, %v409, -inf
        %411 = vmax.xlane.f32.xlu0 %v410
        %v412 = vpop.xlane.xlu0 %411
        %v413 = vsub.f32 %v409, %v412
        %v414 = vmul.f32 %v413, 1.442695
        %v415 = vpow.pop %v414
        %v416 = vmul.f32 %v390, %v415
        %v417 = vsel %vm392, %v416, 0.0
        %418 = vadd.xlane.f32.xlu0 %v417
        %v419 = vpop.xlane.xlu0 %418
        %v420 = vsel %vm392, %v415, 0.0
        %421 = vadd.xlane.f32.xlu0 %v420
        %v422 = vpop.xlane.xlu0 %421
        %v423 = vrcp.pop %v422
        %v424 = vmul.f32 %v419, %v423
        %v425 = vsub.f32 %v407, %v424
        %v426 = vadd.f32 %v425, 0.0
        %v427 = vmax.f32 %v426, 0.0
        %vm428 = vcmask 7168
        %v429 = vsel %vm428, %v427, 0.0
        %430 = vadd.xlane.f32.xlu0 %v429
        %v431 = vpop.xlane.xlu0 %430
        %v432 = vrot.slane %v431, 4
        %v433 = vadd.f32 %v431, %v432
        %v434 = vrot.slane %v433, 2
        %v435 = vadd.f32 %v433, %v434
        %v436 = vrot.slane %v435, 1
        %v437 = vadd.f32 %v435, %v436
        %s438 = vtos %v437
        %vm439 = vcmp.gt.f32.partialorder %v424, %v407
        %v440 = vsel %vm439, 1, 0
        %v441 = vcvt.s32.f32 %v440
        %v442 = vsel %vm428, %v441, 0.0
        %443 = vadd.xlane.f32.xlu0 %v442
        %v444 = vpop.xlane.xlu0 %443
        %v445 = vrot.slane %v444, 4
        %v446 = vadd.f32 %v444, %v445
        %v447 = vrot.slane %v446, 2
        %v448 = vadd.f32 %v446, %v447
        %v449 = vrot.slane %v448, 1
        %v450 = vadd.f32 %v448, %v449
        %s451 = vtos %v450
        %vm452 = vcmp.gt.f32.partialorder %v427, 0.001
        %v453 = vsel %vm452, 1, 0
        %v454 = vcvt.s32.f32 %v453
        %v455 = vsel %vm428, %v454, 0.0
        %456 = vadd.xlane.f32.xlu0 %v455
        %v457 = vpop.xlane.xlu0 %456
        %v458 = vrot.slane %v457, 4
        %v459 = vadd.f32 %v457, %v458
        %v460 = vrot.slane %v459, 2
        %v461 = vadd.f32 %v459, %v460
        %v462 = vrot.slane %v461, 1
        %v463 = vadd.f32 %v461, %v462
        %s464 = vtos %v463
        %v465 = vsel %vm428, %v424, 0.0
        %466 = vadd.xlane.f32.xlu0 %v465
        %v467 = vpop.xlane.xlu0 %466
        %v468 = vrot.slane %v467, 4
        %v469 = vadd.f32 %v467, %v468
        %v470 = vrot.slane %v469, 2
        %v471 = vadd.f32 %v469, %v470
        %v472 = vrot.slane %v471, 1
        %v473 = vadd.f32 %v471, %v472
        %s474 = vtos %v473
        %v475 = vsel %vm428, %v407, 0.0
        %476 = vadd.xlane.f32.xlu0 %v475
        %v477 = vpop.xlane.xlu0 %476
        %v478 = vrot.slane %v477, 4
        %v479 = vadd.f32 %v477, %v478
        %v480 = vrot.slane %v479, 2
        %v481 = vadd.f32 %v479, %v480
        %v482 = vrot.slane %v481, 1
        %v483 = vadd.f32 %v481, %v482
        %s484 = vtos %v483
        %vm485 = vcmp.eq.s32.totalorder %v197, 0
        %v486 = vstv %s438
        %v487 = vsel %vm485, %v486, 0.0
        %vm488 = vcmp.eq.s32.totalorder %v197, 1
        %v489 = vstv %s451
        %v490 = vsel %vm488, %v489, %v487
        %vm491 = vcmp.eq.s32.totalorder %v197, 2
        %v492 = vstv %s464
        %v493 = vsel %vm491, %v492, %v490
        %vm494 = vcmp.eq.s32.totalorder %v197, 3
        %v495 = vstv %s474
        %v496 = vsel %vm494, %v495, %v493
        %vm497 = vcmp.eq.s32.totalorder %v197, 4
        %v498 = vstv %s484
        %v499 = vsel %vm497, %v498, %v496
        %v500 = vld [vmem:[#allocation9] sm:$0x1]
        %v501 = vadd.f32 %v500, %v499
        %502 = vst [vmem:[#allocation9] sm:$0x1] %v501
        %p503 = scmp.eq.s32.totalorder %s22, 1
        // Predicated region
        $region49: #{tpu_custom_call.1} parent=31 // pred_check
          %p504 = pneg %p503
        $region50: #{tpu_custom_call.1} parent=31 // pred_check_branch
          %506 = sbr.rel (%p504) target = $region52
        $region51: #{tpu_custom_call.1} parent=31 // pred_region
          %v507 = vsel %vm491, 1.0, 0.0625
          %v508 = vsel %vm488, 6.25, %v507
          %v509 = vld [vmem:[#allocation9] sm:$0x1]
          %v510 = vmul.f32 %v509, %v508
          %511 = vst [vmem:[#allocation9] sm:$0x1] %v510
        $region52: #{tpu_custom_call.1} parent=31 // pred_fallthru
          _
        // Predicated region
        $region53: #{tpu_custom_call.1} parent=31 // pred_check
          %p512 = pneg %p110
        $region54: #{tpu_custom_call.1} parent=31 // pred_check_branch
          %514 = sbr.rel (%p512) target = $region56
        $region55: #{tpu_custom_call.1} parent=31 // pred_region
          %s516 = ssub.s32 16, 16
          %517 = vsyncadd [#allocation5], %s516
          %s518 = smul.addr %s21, 16
          %s519 = scalar_lea.hbm %s3, %s518
          %s521 = sshll.u32 [#allocation9], 4
          %s522 = int_to_ptr.vmem [resolvable:$true] %s521
          %524 = dma.vmem_to_hbm [thread:$0]  %s522, 16, %s519, [#allocation5]
        $region56: #{tpu_custom_call.1} parent=31 // pred_fallthru
          _
        // Predicated region
        $region57: #{tpu_custom_call.1} parent=31 // pred_check
          %p525 = pneg %p110
        $region58: #{tpu_custom_call.1} parent=31 // pred_check_branch
          %527 = sbr.rel (%p525) target = $region60
        $region59: #{tpu_custom_call.1} parent=31 // pred_region
          %528 = dma.done [#allocation5], 16
        $region60: #{tpu_custom_call.1} parent=31 // pred_fallthru
          _
      $region32: #{tpu_custom_call.1} parent=5 // pred_fallthru
        _
      %p529 = scmp.le.s32.totalorder 2, %s12
      // Predicated region
      $region61: #{tpu_custom_call.1} parent=5 // pred_check
        %p530 = pneg %p529
      $region62: #{tpu_custom_call.1} parent=5 // pred_check_branch
        %532 = sbr.rel (%p530) target = $region64
      $region63: #{tpu_custom_call.1} parent=5 // pred_region
        %s533 = ssub.s32 %s12, 2
      $region64: #{tpu_custom_call.1} parent=5 // pred_fallthru
        _
    $region6: #{tpu_custom_call.1} parent=1 // loop_footer
      %s16 = sadd.s32 1, %s12
    $region7: #{tpu_custom_call.1} parent=1 // loop_footer_branch
      %11 = sbr.rel target = $region3
    $region8: #{tpu_custom_call.1} parent=1 // loop_exit
      _
    %534 = vsyncpa [#allocation4], 1
    %s535 = scalar_lea.sflag [#allocation4], 1
    %536 = vsyncpa %s535, 1
    %537 = vsyncpa [#allocation7], 1
    %538 = vsyncpa [#allocation5], 1
    %s539 = scalar_lea.sflag [#allocation5], 1
    %540 = vsyncpa %s539, 1

</llo_original>
